<compile_context>
chip_gen: v5e
topology: v5e:2x2
jax: 0.10.0
libtpu: 0.0.40
codegen_flags: <defaults>
</compile_context>

<pallas_src>
import functools

import jax
import jax.numpy as jnp
from jax import lax
from jax.experimental import pallas as pl
from jax.experimental.pallas import tpu as pltpu


def _round_up(x, m):
    return ((x + m - 1) // m) * m


def _pick_tile(total, cap, align):
    """Largest tile <= cap that is a multiple of `align` and divides `total`.
    Falls back to the full extent (always a legal block)."""
    if total <= cap:
        return total
    t = (cap // align) * align
    while t >= align:
        if total % t == 0:
            return t
        t -= align
    return total


def _vmem_limit_bytes():
    # ~75% of the physical per-core VMEM (leaves double-buffer / spill headroom
    # on v7x's 64 MiB); safe static fallback if the query is unavailable.
    try:
        cap = int(pltpu.get_tpu_info().vmem_capacity_bytes)
        if cap >= 32 * 1024 * 1024:
            return max(32 * 1024 * 1024, min(int(cap * 0.75), 96 * 1024 * 1024))
    except Exception:
        pass
    return 48 * 1024 * 1024


# ----------------------------------------------------------------------------
# Kernel 1 (fused): feature extraction + streaming mean / covariance for BOTH
# image sets.  grid = (set, batch tiles, channel tiles).
# ----------------------------------------------------------------------------
def _feat_stats_kernel(ref_ref, dist_ref, w_ref, b_ref, mu_ref, sigma_ref,
                       acc_ref, *, n_true, inv_hw, tn, mask_tail):
    s = pl.program_id(0)      # image set: 0 = ref, 1 = dist   (parallel, v7x)
    i = pl.program_id(1)      # batch tile                      (reduction)
    kk = pl.program_id(2)     # channel tile                    (reduction)

    # mu / sigma output blocks are resident across (i, kk): zero at the start
    # of each set, accumulate into them directly (no DP x DP scratch).
    @pl.when((i == 0) & (kk == 0))
    def _():
        mu_ref[...] = jnp.zeros_like(mu_ref)
        sigma_ref[...] = jnp.zeros_like(sigma_ref)

    @pl.when(kk == 0)
    def _():
        acc_ref[...] = jnp.zeros_like(acc_ref)

    # Select the active image tile.  The inactive input's index_map is pinned
    # to block 0, so it is DMA'd once and never re-fetched; the select is VPU
    # filler on a DMA-bound stage.
    x = jnp.where(s == 0, ref_ref[...], dist_ref[...])        # (tn, tc, HW) f32
    pooled = jnp.sum(x, axis=-1) * inv_hw                     # (tn, tc)  f32
    # Projection on the MXU with the UNEXPANDED (tc, DP) weight; f32 accumulate.
    acc_ref[...] += jnp.dot(pooled.astype(jnp.bfloat16), w_ref[...],
                            preferred_element_type=jnp.float32)

    @pl.when(kk == pl.num_programs(2) - 1)
    def _():
        # Feature epilogue (bias + ReLU) in f32, then stats accumulation.
        f = jnp.maximum(acc_ref[...] + b_ref[...], 0.0)        # (tn, DP) f32
        if mask_tail:
            # Zero rows that belong to batch padding (bias+ReLU would otherwise
            # make the padded rows non-zero).
            rows = i * tn + lax.broadcasted_iota(jnp.int32, (tn, 1), 0)
            f = jnp.where(rows < n_true, f, 0.0)
        mu_ref[...] += jnp.sum(f, axis=0, keepdims=True)
        # f^T f without materializing the transpose: contract dim 0 on the MXU.
        sigma_ref[...] += lax.dot_general(
            f, f, (((0,), (0,)), ((), ())),
            preferred_element_type=jnp.float32)

    @pl.when((i == pl.num_programs(1) - 1) & (kk == pl.num_programs(2) - 1))
    def _():
        inv_n = 1.0 / n_true
        inv_nm1 = 1.0 / max(n_true - 1.0, 1.0)   # guard N == 1
        mu = mu_ref[...] * inv_n                                # (1, DP)
        outer = lax.dot_general(mu, mu, (((0,), (0,)), ((), ())),
                                preferred_element_type=jnp.float32)
        mu_ref[...] = mu
        sigma_ref[...] = (sigma_ref[...] - n_true * outer) * inv_nm1


def extract_feature_stats_pair(ref, dist, w, b):
    n, c, h, wd = ref.shape
    hw = h * wd
    d = w.shape[1]
    dp = _round_up(d, 128)   # lane-dense feature dim (zero cols transparent for FID)

    # Tiny host-side prep of the (unexpanded) projection parameters.
    w_p = jnp.pad(w.astype(jnp.float32), ((0, 0), (0, dp - d))).astype(jnp.bfloat16)
    b_p = jnp.pad(b.astype(jnp.float32).reshape(1, d), ((0, 0), (0, dp - d)))

    # Batch tile: up to 256 (>=128 Gram contraction at real scale); pad the
    # batch to a tile multiple (padded rows masked in-kernel).
    tn = min(256, _round_up(n, 8))
    n_pad = _round_up(n, tn)
    tc = _pick_tile(c, 256, 8)

    x_ref = ref.astype(jnp.float32).reshape(n, c, hw)
    x_dist = dist.astype(jnp.float32).reshape(n, c, hw)
    if n_pad != n:
        padding = ((0, n_pad - n), (0, 0), (0, 0))
        x_ref = jnp.pad(x_ref, padding)
        x_dist = jnp.pad(x_dist, padding)

    grid = (2, n_pad // tn, c // tc)

    kernel = functools.partial(_feat_stats_kernel, n_true=float(n),
                               inv_hw=1.0 / float(hw), tn=tn,
                               mask_tail=(n_pad != n))

    flops = 2 * (n * c * hw + 2 * n_pad * c * dp + 2 * n_pad * dp * dp)
    bytes_accessed = 4 * (2 * n_pad * c * hw) + 2 * c * dp + 4 * 2 * (dp + dp * dp)

    mu, sigma = pl.pallas_call(
        kernel,
        out_shape=(
            jax.ShapeDtypeStruct((2, 1, dp), jnp.float32),
            jax.ShapeDtypeStruct((2, dp, dp), jnp.float32),
        ),
        grid_spec=pltpu.PrefetchScalarGridSpec(
            num_scalar_prefetch=0,
            grid=grid,
            in_specs=[
                # Active set streams real blocks; the other set is pinned to
                # block 0 (fetched once, never re-fetched).
                pl.BlockSpec((tn, tc, hw),
                             lambda s, i, kk: (i * (1 - s), kk * (1 - s), 0)),
                pl.BlockSpec((tn, tc, hw),
                             lambda s, i, kk: (i * s, kk * s, 0)),
                pl.BlockSpec((tc, dp), lambda s, i, kk: (kk, 0)),
                pl.BlockSpec((1, dp), lambda s, i, kk: (0, 0)),
            ],
            out_specs=[
                pl.BlockSpec((None, 1, dp), lambda s, i, kk: (s, 0, 0)),
                pl.BlockSpec((None, dp, dp), lambda s, i, kk: (s, 0, 0)),
            ],
            scratch_shapes=[pltpu.VMEM((tn, dp), jnp.float32)],
        ),
        compiler_params=pltpu.CompilerParams(
            dimension_semantics=("parallel", "arbitrary", "arbitrary"),
            vmem_limit_bytes=_vmem_limit_bytes(),
        ),
        cost_estimate=pl.CostEstimate(
            flops=int(flops), transcendentals=0,
            bytes_accessed=int(bytes_accessed)),
    )(x_ref, x_dist, w_p, b_p)
    return mu, sigma


# ----------------------------------------------------------------------------
# Kernel 2: fused covariance product  A @ B @ A  (A = sqrtm(S1), B = S2).
# A resident (fetched once); B streamed in row tiles over an "arbitrary" axis;
# output column tile is the accumulator (resident across that axis).
# ----------------------------------------------------------------------------
def _aba_kernel(a_ref, b_ref, o_ref, *, tj, tr):
    j = pl.program_id(0)      # output column tile  (parallel)
    r = pl.program_id(1)      # B row tile == contraction block (arbitrary)

    @pl.when(r == 0)
    def _():
        o_ref[...] = jnp.zeros_like(o_ref)

    a_cols_j = a_ref[:, pl.ds(pl.multiple_of(j * tj, 128), tj)]   # (DP, tj)
    a_cols_r = a_ref[:, pl.ds(pl.multiple_of(r * tr, 128), tr)]   # (DP, tr)
    # B[rblk, :] @ A[:, jblk]  -> (tr, tj), then A[:, rblk] @ tmp -> (DP, tj).
    tmp = jnp.dot(b_ref[...], a_cols_j, preferred_element_type=jnp.float32)
    o_ref[...] += jnp.dot(a_cols_r, tmp, preferred_element_type=jnp.float32)


def covariance_product(a, b):
    dp = a.shape[0]
    tj = _pick_tile(dp, 256, 128)
    tr = _pick_tile(dp, 256, 128)
    grid = (dp // tj, dp // tr)
    kernel = functools.partial(_aba_kernel, tj=tj, tr=tr)
    return pl.pallas_call(
        kernel,
        out_shape=jax.ShapeDtypeStruct((dp, dp), jnp.float32),
        grid_spec=pltpu.PrefetchScalarGridSpec(
            num_scalar_prefetch=0,
            grid=grid,
            in_specs=[
                pl.BlockSpec((dp, dp), lambda j, r: (0, 0)),   # A resident
                pl.BlockSpec((tr, dp), lambda j, r: (r, 0)),   # B row tiles
            ],
            out_specs=pl.BlockSpec((dp, tj), lambda j, r: (0, j)),
        ),
        compiler_params=pltpu.CompilerParams(
            dimension_semantics=("parallel", "arbitrary"),
            vmem_limit_bytes=_vmem_limit_bytes(),
        ),
        cost_estimate=pl.CostEstimate(
            flops=int(4 * dp * dp * dp), transcendentals=0,
            bytes_accessed=int(4 * dp * dp * (2 + dp // tj + 1))),
    )(a, b)


# ----------------------------------------------------------------------------
# Frechet (FID) distance from means / covariances
# ----------------------------------------------------------------------------
def _sqrtm_psd(a):
    # TODO(synk): matrix square root needs an eigendecomposition; no clean
    # Pallas equivalent, so it stays in jnp.linalg (XLA) land.
    w, v = jnp.linalg.eigh((a + a.T) * 0.5)
    w = jnp.clip(w, 0.0, None)
    return (v * jnp.sqrt(w)[None, :]) @ v.T


def frechet_distance(mu1, sigma1, mu2, sigma2):
    diff = (mu1 - mu2).reshape(-1)
    # tr(sqrtm(S1 @ S2)) via the symmetric form sqrt(S1) S2 sqrt(S1).
    s1_half = _sqrtm_psd(sigma1)
    m = covariance_product(s1_half, sigma2)          # fused Pallas kernel
    ev = jnp.clip(jnp.linalg.eigvalsh((m + m.T) * 0.5), 0.0, None)
    tr_covmean = jnp.sum(jnp.sqrt(ev))
    return (jnp.sum(diff * diff)
            + jnp.trace(sigma1) + jnp.trace(sigma2)
            - 2.0 * tr_covmean)


# ----------------------------------------------------------------------------
# MetricModel.forward equivalent
# ----------------------------------------------------------------------------
def metric_model_forward(ref, dist, w_feat, b_feat):
    # self.model.features(ref) / .features(dist) + FID mean/cov, one fused call.
    mus, sigmas = extract_feature_stats_pair(ref, dist, w_feat, b_feat)
    return frechet_distance(mus[0], sigmas[0], mus[1], sigmas[1])


if __name__ == "__main__":
    # Small shapes: batch=16 images (several samples needed for a covariance),
    # channels=4, spatial=16x16, feature dim=32 (padded to 128 internally).
    N, C, H, W, D = 16, 4, 16, 16, 32

    key = jax.random.PRNGKey(0)
    k_ref, k_dist, k_w, k_b = jax.random.split(key, 4)
    ref = jax.random.normal(k_ref, (N, C, H, W), dtype=jnp.float32)
    dist = jax.random.normal(k_dist, (N, C, H, W), dtype=jnp.float32)

    # Deterministic synthetic "backbone" parameters.
    w_feat = jax.random.normal(k_w, (C, D), dtype=jnp.float32) * 0.5
    b_feat = jax.random.normal(k_b, (D,), dtype=jnp.float32) * 0.1

    fid = metric_model_forward(ref, dist, w_feat, b_feat)
    fid = jax.block_until_ready(fid)
    assert jnp.isfinite(fid)
    print("KERNEL_OK")
</pallas_src>

<mosaic_0001>
module attributes {stable_mosaic.version = 11 : i64} {
  func.func @_feat_stats_kernel(%arg0: i32, %arg1: i32, %arg2: i32, %arg3: memref<16x4x256xf32, #tpu.memory_space<vmem>>, %arg4: memref<16x4x256xf32, #tpu.memory_space<vmem>>, %arg5: memref<4x128xbf16, #tpu.memory_space<vmem>>, %arg6: memref<1x128xf32, #tpu.memory_space<vmem>>, %arg7: memref<1x1x128xf32, #tpu.memory_space<vmem>>, %arg8: memref<1x128x128xf32, #tpu.memory_space<vmem>>, %arg9: memref<16x128xf32, #tpu.memory_space<vmem>>) attributes {dimension_semantics = [#tpu.dimension_semantics<parallel>, #tpu.dimension_semantics<arbitrary>, #tpu.dimension_semantics<arbitrary>], iteration_bounds = array<i64: 2, 1, 1>, scalar_prefetch = 0 : i64, scratch_operands = 1 : i64, tpu.core_type = #tpu.core_type<tc>, window_params = [{transform_indices = @transform_0, window_bounds = array<i64: 16, 4, 256>}, {transform_indices = @transform_1, window_bounds = array<i64: 16, 4, 256>}, {transform_indices = @transform_2, window_bounds = array<i64: 4, 128>}, {pipeline_mode = #tpu.pipeline_mode<synchronous>, transform_indices = @transform_3, window_bounds = array<i64: 1, 128>}, {transform_indices = @transform_4, window_bounds = array<i64: 1, 1, 128>}, {transform_indices = @transform_5, window_bounds = array<i64: 1, 128, 128>}]} {
    %c0_i32 = arith.constant 0 : i32
    %0 = arith.cmpi eq, %arg1, %c0_i32 : i32
    %c0_i32_0 = arith.constant 0 : i32
    %1 = arith.cmpi eq, %arg2, %c0_i32_0 : i32
    %2 = arith.andi %0, %1 : i1
    %3 = arith.extui %2 : i1 to i32
    %c0_i32_1 = arith.constant 0 : i32
    %4 = arith.cmpi ne, %3, %c0_i32_1 : i32
    scf.if %4 {
      %cst_23 = arith.constant 0.000000e+00 : f32
      %29 = vector.broadcast %cst_23 : f32 to vector<1x128xf32>
      %c0_24 = arith.constant 0 : index
      %c0_25 = arith.constant 0 : index
      %c0_26 = arith.constant 0 : index
      %30 = vector.load %arg7[%c0_24, %c0_25, %c0_26] : memref<1x1x128xf32, #tpu.memory_space<vmem>>, vector<1x1x128xf32>
      %31 = vector.shape_cast %30 : vector<1x1x128xf32> to vector<1x128xf32>
      %32 = vector.shape_cast %29 : vector<1x128xf32> to vector<1x1x128xf32>
      tpu.vector_store %arg7[%c0_24, %c0_25, %c0_26], %32 {strides = array<i32>} : memref<1x1x128xf32, #tpu.memory_space<vmem>>, vector<1x1x128xf32>,
      %cst_27 = arith.constant 0.000000e+00 : f32
      %33 = vector.broadcast %cst_27 : f32 to vector<128x128xf32>
      %c0_28 = arith.constant 0 : index
      %c0_29 = arith.constant 0 : index
      %c0_30 = arith.constant 0 : index
      %34 = vector.load %arg8[%c0_28, %c0_29, %c0_30] : memref<1x128x128xf32, #tpu.memory_space<vmem>>, vector<1x128x128xf32>
      %35 = vector.shape_cast %34 : vector<1x128x128xf32> to vector<128x128xf32>
      %36 = vector.shape_cast %33 : vector<128x128xf32> to vector<1x128x128xf32>
      tpu.vector_store %arg8[%c0_28, %c0_29, %c0_30], %36 {strides = array<i32>} : memref<1x128x128xf32, #tpu.memory_space<vmem>>, vector<1x128x128xf32>,
    } else {
    }
    %c0_i32_2 = arith.constant 0 : i32
    %5 = arith.cmpi eq, %arg2, %c0_i32_2 : i32
    %6 = arith.extui %5 : i1 to i32
    %c0_i32_3 = arith.constant 0 : i32
    %7 = arith.cmpi ne, %6, %c0_i32_3 : i32
    scf.if %7 {
      %cst_23 = arith.constant 0.000000e+00 : f32
      %29 = vector.broadcast %cst_23 : f32 to vector<16x128xf32>
      %c0_24 = arith.constant 0 : index
      %c0_25 = arith.constant 0 : index
      %30 = vector.load %arg9[%c0_24, %c0_25] : memref<16x128xf32, #tpu.memory_space<vmem>>, vector<16x128xf32>
      tpu.vector_store %arg9[%c0_24, %c0_25], %29 {strides = array<i32>} : memref<16x128xf32, #tpu.memory_space<vmem>>, vector<16x128xf32>,
    } else {
    }
    %c0_i32_4 = arith.constant 0 : i32
    %8 = arith.cmpi eq, %arg0, %c0_i32_4 : i32
    %c0 = arith.constant 0 : index
    %c0_5 = arith.constant 0 : index
    %c0_6 = arith.constant 0 : index
    %9 = vector.load %arg3[%c0, %c0_5, %c0_6] : memref<16x4x256xf32, #tpu.memory_space<vmem>>, vector<16x4x256xf32>
    %c0_7 = arith.constant 0 : index
    %c0_8 = arith.constant 0 : index
    %c0_9 = arith.constant 0 : index
    %10 = vector.load %arg4[%c0_7, %c0_8, %c0_9] : memref<16x4x256xf32, #tpu.memory_space<vmem>>, vector<16x4x256xf32>
    %11 = arith.select %8, %9, %10 : vector<16x4x256xf32>
    %cst = arith.constant dense<0.000000e+00> : vector<16x4xf32>
    %12 = vector.multi_reduction <add>, %11, %cst [2] : vector<16x4x256xf32> to vector<16x4xf32>
    %cst_10 = arith.constant 3.906250e-03 : f32
    %13 = vector.broadcast %cst_10 : f32 to vector<16x4xf32>
    %14 = arith.mulf %12, %13 : vector<16x4xf32>
    %c0_11 = arith.constant 0 : index
    %c0_12 = arith.constant 0 : index
    %15 = vector.load %arg9[%c0_11, %c0_12] : memref<16x128xf32, #tpu.memory_space<vmem>>, vector<16x128xf32>
    %16 = arith.truncf %14 : vector<16x4xf32> to vector<16x4xbf16>
    %c0_13 = arith.constant 0 : index
    %c0_14 = arith.constant 0 : index
    %17 = vector.load %arg5[%c0_13, %c0_14] : memref<4x128xbf16, #tpu.memory_space<vmem>>, vector<4x128xbf16>
    %cst_15 = arith.constant dense<0.000000e+00> : vector<16x128xf32>
    %18 = tpu.matmul %16, %17, %cst_15 {dimension_numbers = #tpu.dot_dimension_numbers<[1], [0], [0], [1], [0, 0, 1, 1], [], []>} : vector<16x4xbf16>, vector<4x128xbf16>, vector<16x128xf32> -> vector<16x128xf32>
    %19 = arith.addf %15, %18 : vector<16x128xf32>
    %c0_16 = arith.constant 0 : index
    %c0_17 = arith.constant 0 : index
    %20 = vector.load %arg9[%c0_16, %c0_17] : memref<16x128xf32, #tpu.memory_space<vmem>>, vector<16x128xf32>
    tpu.vector_store %arg9[%c0_16, %c0_17], %19 {strides = array<i32>} : memref<16x128xf32, #tpu.memory_space<vmem>>, vector<16x128xf32>,
    %c0_i32_18 = arith.constant 0 : i32
    %21 = arith.cmpi eq, %arg2, %c0_i32_18 : i32
    %22 = arith.extui %21 : i1 to i32
    %c0_i32_19 = arith.constant 0 : i32
    %23 = arith.cmpi ne, %22, %c0_i32_19 : i32
    scf.if %23 {
      %c0_23 = arith.constant 0 : index
      %c0_24 = arith.constant 0 : index
      %29 = vector.load %arg9[%c0_23, %c0_24] : memref<16x128xf32, #tpu.memory_space<vmem>>, vector<16x128xf32>
      %c0_25 = arith.constant 0 : index
      %c0_26 = arith.constant 0 : index
      %30 = vector.load %arg6[%c0_25, %c0_26] : memref<1x128xf32, #tpu.memory_space<vmem>>, vector<1x128xf32>
      %31 = vector.broadcast %30 : vector<1x128xf32> to vector<16x128xf32>
      %32 = arith.addf %29, %31 : vector<16x128xf32>
      %cst_27 = arith.constant 0.000000e+00 : f32
      %33 = vector.broadcast %cst_27 : f32 to vector<16x128xf32>
      %34 = arith.maximumf %32, %33 : vector<16x128xf32>
      %c0_28 = arith.constant 0 : index
      %c0_29 = arith.constant 0 : index
      %c0_30 = arith.constant 0 : index
      %35 = vector.load %arg7[%c0_28, %c0_29, %c0_30] : memref<1x1x128xf32, #tpu.memory_space<vmem>>, vector<1x1x128xf32>
      %36 = vector.shape_cast %35 : vector<1x1x128xf32> to vector<1x128xf32>
      %cst_31 = arith.constant dense<0.000000e+00> : vector<128xf32>
      %37 = vector.multi_reduction <add>, %34, %cst_31 [0] : vector<16x128xf32> to vector<128xf32>
      %38 = vector.shape_cast %37 : vector<128xf32> to vector<1x128xf32>
      %39 = arith.addf %36, %38 : vector<1x128xf32>
      %c0_32 = arith.constant 0 : index
      %c0_33 = arith.constant 0 : index
      %c0_34 = arith.constant 0 : index
      %40 = vector.load %arg7[%c0_32, %c0_33, %c0_34] : memref<1x1x128xf32, #tpu.memory_space<vmem>>, vector<1x1x128xf32>
      %41 = vector.shape_cast %40 : vector<1x1x128xf32> to vector<1x128xf32>
      %42 = vector.shape_cast %39 : vector<1x128xf32> to vector<1x1x128xf32>
      tpu.vector_store %arg7[%c0_32, %c0_33, %c0_34], %42 {strides = array<i32>} : memref<1x1x128xf32, #tpu.memory_space<vmem>>, vector<1x1x128xf32>,
      %c0_35 = arith.constant 0 : index
      %c0_36 = arith.constant 0 : index
      %c0_37 = arith.constant 0 : index
      %43 = vector.load %arg8[%c0_35, %c0_36, %c0_37] : memref<1x128x128xf32, #tpu.memory_space<vmem>>, vector<1x128x128xf32>
      %44 = vector.shape_cast %43 : vector<1x128x128xf32> to vector<128x128xf32>
      %cst_38 = arith.constant dense<0.000000e+00> : vector<128x128xf32>
      %45 = tpu.matmul %34, %34, %cst_38 {dimension_numbers = #tpu.dot_dimension_numbers<[0], [0], [1], [1], [0, 1, 1, 1], [], []>} : vector<16x128xf32>, vector<16x128xf32>, vector<128x128xf32> -> vector<128x128xf32>
      %46 = arith.addf %44, %45 : vector<128x128xf32>
      %c0_39 = arith.constant 0 : index
      %c0_40 = arith.constant 0 : index
      %c0_41 = arith.constant 0 : index
      %47 = vector.load %arg8[%c0_39, %c0_40, %c0_41] : memref<1x128x128xf32, #tpu.memory_space<vmem>>, vector<1x128x128xf32>
      %48 = vector.shape_cast %47 : vector<1x128x128xf32> to vector<128x128xf32>
      %49 = vector.shape_cast %46 : vector<128x128xf32> to vector<1x128x128xf32>
      tpu.vector_store %arg8[%c0_39, %c0_40, %c0_41], %49 {strides = array<i32>} : memref<1x128x128xf32, #tpu.memory_space<vmem>>, vector<1x128x128xf32>,
    } else {
    }
    %c0_i32_20 = arith.constant 0 : i32
    %24 = arith.cmpi eq, %arg1, %c0_i32_20 : i32
    %c0_i32_21 = arith.constant 0 : i32
    %25 = arith.cmpi eq, %arg2, %c0_i32_21 : i32
    %26 = arith.andi %24, %25 : i1
    %27 = arith.extui %26 : i1 to i32
    %c0_i32_22 = arith.constant 0 : i32
    %28 = arith.cmpi ne, %27, %c0_i32_22 : i32
    scf.if %28 {
      %c0_23 = arith.constant 0 : index
      %c0_24 = arith.constant 0 : index
      %c0_25 = arith.constant 0 : index
      %29 = vector.load %arg7[%c0_23, %c0_24, %c0_25] : memref<1x1x128xf32, #tpu.memory_space<vmem>>, vector<1x1x128xf32>
      %30 = vector.shape_cast %29 : vector<1x1x128xf32> to vector<1x128xf32>
      %cst_26 = arith.constant 6.250000e-02 : f32
      %31 = vector.broadcast %cst_26 : f32 to vector<1x128xf32>
      %32 = arith.mulf %30, %31 : vector<1x128xf32>
      %cst_27 = arith.constant dense<0.000000e+00> : vector<128x128xf32>
      %33 = tpu.matmul %32, %32, %cst_27 {dimension_numbers = #tpu.dot_dimension_numbers<[0], [0], [1], [1], [0, 1, 1, 1], [], []>} : vector<1x128xf32>, vector<1x128xf32>, vector<128x128xf32> -> vector<128x128xf32>
      %c0_28 = arith.constant 0 : index
      %c0_29 = arith.constant 0 : index
      %c0_30 = arith.constant 0 : index
      %34 = vector.load %arg7[%c0_28, %c0_29, %c0_30] : memref<1x1x128xf32, #tpu.memory_space<vmem>>, vector<1x1x128xf32>
      %35 = vector.shape_cast %34 : vector<1x1x128xf32> to vector<1x128xf32>
      %36 = vector.shape_cast %32 : vector<1x128xf32> to vector<1x1x128xf32>
      tpu.vector_store %arg7[%c0_28, %c0_29, %c0_30], %36 {strides = array<i32>} : memref<1x1x128xf32, #tpu.memory_space<vmem>>, vector<1x1x128xf32>,
      %c0_31 = arith.constant 0 : index
      %c0_32 = arith.constant 0 : index
      %c0_33 = arith.constant 0 : index
      %37 = vector.load %arg8[%c0_31, %c0_32, %c0_33] : memref<1x128x128xf32, #tpu.memory_space<vmem>>, vector<1x128x128xf32>
      %38 = vector.shape_cast %37 : vector<1x128x128xf32> to vector<128x128xf32>
      %cst_34 = arith.constant 1.600000e+01 : f32
      %39 = vector.broadcast %cst_34 : f32 to vector<128x128xf32>
      %40 = arith.mulf %39, %33 : vector<128x128xf32>
      %41 = arith.subf %38, %40 : vector<128x128xf32>
      %cst_35 = arith.constant 0.0666666701 : f32
      %42 = vector.broadcast %cst_35 : f32 to vector<128x128xf32>
      %43 = arith.mulf %41, %42 : vector<128x128xf32>
      %c0_36 = arith.constant 0 : index
      %c0_37 = arith.constant 0 : index
      %c0_38 = arith.constant 0 : index
      %44 = vector.load %arg8[%c0_36, %c0_37, %c0_38] : memref<1x128x128xf32, #tpu.memory_space<vmem>>, vector<1x128x128xf32>
      %45 = vector.shape_cast %44 : vector<1x128x128xf32> to vector<128x128xf32>
      %46 = vector.shape_cast %43 : vector<128x128xf32> to vector<1x128x128xf32>
      tpu.vector_store %arg8[%c0_36, %c0_37, %c0_38], %46 {strides = array<i32>} : memref<1x128x128xf32, #tpu.memory_space<vmem>>, vector<1x128x128xf32>,
    } else {
    }
    return
  }
  func.func @transform_0(%arg0: i32, %arg1: i32, %arg2: i32) -> (i32, i32, i32) {
    %c1_i32 = arith.constant 1 : i32
    %0 = arith.subi %c1_i32, %arg0 : i32
    %1 = arith.muli %arg1, %0 : i32
    %c1_i32_0 = arith.constant 1 : i32
    %2 = arith.subi %c1_i32_0, %arg0 : i32
    %3 = arith.muli %arg2, %2 : i32
    %c0_i32 = arith.constant 0 : i32
    %c0_i32_1 = arith.constant 0 : i32
    return %1, %3, %c0_i32 : i32, i32, i32
  }
  func.func @transform_1(%arg0: i32, %arg1: i32, %arg2: i32) -> (i32, i32, i32) {
    %0 = arith.muli %arg1, %arg0 : i32
    %1 = arith.muli %arg2, %arg0 : i32
    %c0_i32 = arith.constant 0 : i32
    %c0_i32_0 = arith.constant 0 : i32
    return %0, %1, %c0_i32 : i32, i32, i32
  }
  func.func @transform_2(%arg0: i32, %arg1: i32, %arg2: i32) -> (i32, i32) {
    %c0_i32 = arith.constant 0 : i32
    %c0_i32_0 = arith.constant 0 : i32
    return %arg2, %c0_i32 : i32, i32
  }
  func.func @transform_3(%arg0: i32, %arg1: i32, %arg2: i32) -> (i32, i32) {
    %c0_i32 = arith.constant 0 : i32
    %c0_i32_0 = arith.constant 0 : i32
    %c0_i32_1 = arith.constant 0 : i32
    return %c0_i32, %c0_i32_0 : i32, i32
  }
  func.func @transform_4(%arg0: i32, %arg1: i32, %arg2: i32) -> (i32, i32, i32) {
    %c0_i32 = arith.constant 0 : i32
    %c0_i32_0 = arith.constant 0 : i32
    %c0_i32_1 = arith.constant 0 : i32
    return %arg0, %c0_i32, %c0_i32_0 : i32, i32, i32
  }
  func.func @transform_5(%arg0: i32, %arg1: i32, %arg2: i32) -> (i32, i32, i32) {
    %c0_i32 = arith.constant 0 : i32
    %c0_i32_0 = arith.constant 0 : i32
    %c0_i32_1 = arith.constant 0 : i32
    return %arg0, %c0_i32, %c0_i32_0 : i32, i32, i32
  }
}

</mosaic_0001>

<llo_original>
// kernel: tpu_custom_call.1
$region0: #{tpu_custom_call.1}
  #allocation0 [shape = 'u32[]', space=smem, size = 0x4, offset = 0x4, fixed_abs, tag = 'smem constant byte address 0x4 - core index']
  #allocation1 [shape = 'u32[72,128]{1,0:T(1,128)}', space=vmem, size = 0x9000, scoped, tag = 'internal scratch']
  #allocation2 [shape = 'f32[16,128]{1,0:T(8,128)}', space=vmem, size = 0x2000, scoped, tag = 'scratch operand']
  %s0 = inlined_call_operand.hbm [shape: f32[16,4,256], index: 0, kind: input, shape index: {}]
  %s1 = inlined_call_operand.hbm [shape: f32[16,4,256], index: 1, kind: input, shape index: {}]
  %s2 = inlined_call_operand.hbm [shape: bf16[4,128], index: 2, kind: input, shape index: {}]
  %s3 = inlined_call_operand.vmem [shape: f32[1,128], index: 3, kind: input, shape index: {}]
  %s4 = inlined_call_operand.hbm [shape: f32[2,1,128], index: 4, kind: output, shape index: {0}]
  %s5 = inlined_call_operand.hbm [shape: f32[2,128,128], index: 5, kind: output, shape index: {1}]
  %6 = xla_tuple %s4, %s5
  %s7 = sld [smem:[#allocation0]]
  $region85: #{tpu_custom_call.1} parent=0
    _
  %s9 = ssub.s32 1, %s7
  %s10 = scalar_select 0, %s9, %s7
  $region1: #{tpu_custom_call.1} parent=0
    #allocation3 [shape = 'u8[131072]{0}', space=vmem, size = 0x20000, scoped, tag = 'input window, operand 0']
    #allocation4 [shape = 's32[2]{0}', space=sflag, size = 0x8, scoped, tag = 'scoped memory for tpu_custom_call.1']
    #allocation5 [shape = 's32[2]{0}', space=sflag, size = 0x8, scoped, tag = 'scoped memory for tpu_custom_call.1']
    #allocation6 [shape = 'u8[131072]{0}', space=vmem, size = 0x20000, scoped, tag = 'input window, operand 1']
    #allocation7 [shape = 's32[2]{0}', space=sflag, size = 0x8, scoped, tag = 'scoped memory for tpu_custom_call.1']
    #allocation8 [shape = 'u8[1024]{0}', space=vmem, size = 0x400, scoped, tag = 'input window, operand 2, single buffered']
    #allocation9 [shape = 'u8[1024]{0}', space=vmem, size = 0x400, scoped, tag = 'output window, operand 0']
    #allocation10 [shape = 'u8[131072]{0}', space=vmem, size = 0x20000, scoped, tag = 'output window, operand 1']
    #allocation11 [shape = 's32[2]{0}', space=sflag, size = 0x8, scoped, tag = 'scoped memory for tpu_custom_call.1']
    %11 = vsyncpa [#allocation4], 0
    %s12 = scalar_lea.sflag [#allocation4], 1
    %13 = vsyncpa %s12, 0
    %14 = vsyncpa [#allocation7], 0
    %s15 = scalar_lea.sflag [#allocation7], 1
    %16 = vsyncpa %s15, 0
    %17 = vsyncpa [#allocation5], 0
    %s18 = scalar_lea.sflag [#allocation5], 1
    %19 = vsyncpa %s18, 0
    %20 = vsyncpa [#allocation11], 0
    %s21 = scalar_lea.sflag [#allocation11], 1
    %22 = vsyncpa %s21, 0
    loop: start=0, step=1, limit=4
    $region2: #{tpu_custom_call.1} parent=1 // loop_pre_header
      _
    $region3: #{tpu_custom_call.1} parent=1 // loop_header
      %s24 = sphi 0, %s28
      %p25 = scmp.ge.s32.totalorder %s24, 4
      %s31 = sphi 0, %s50
      %s32 = sphi 0, %s46
      %s33 = sphi 0, %s42
      %s34 = sphi 0, %s31
      %s35 = sphi 0, %s32
      %s36 = sphi 0, %s33
      %s37 = sphi 0, %s34
      %s38 = sphi 0, %s35
      %s39 = sphi 0, %s36
      %s61 = sphi 0, %s63
      %s64 = sphi 0, %s61
      %s65 = sphi 0, %s64
      %s81 = sphi 0, %s65
      %s93 = sphi 0, %s95
      %s96 = sphi 0, %s93
      %s97 = sphi 0, %s96
      %s113 = sphi 0, %s97
      %s119 = sphi 0, %s121
      %s122 = sphi 0, %s119
      %s123 = sphi 0, %s122
      %s139 = sphi 0, %s123
      %s143 = sphi 0, %s143
      %s145 = sphi 0, %s143
      %s146 = sphi 0, %s145
      %s160 = sphi 0, %s146
      %s166 = sphi 0, %s168
      %s169 = sphi 0, %s166
      %s170 = sphi 0, %s169
      %s186 = sphi 0, %s170
      %s192 = sphi 0, %s194
      %s195 = sphi 0, %s192
      %s196 = sphi 0, %s195
      %s212 = sphi 0, %s196
    $region4: #{tpu_custom_call.1} parent=1 // loop_header_branch
      %27 = sbr.rel (%p25) target = $region8
    $region5: #{tpu_custom_call.1} parent=1 // loop_body
      %s29 = ssub.s32 %s24, 1
      %s30 = ssub.s32 %s24, 2
      %s40 = sadd.s32 1, %s33
      %p41 = scmp.ge.s32.totalorder %s40, 1
      %s42 = scalar_select %p41, 0, %s40
      %s43 = sadd.s32 1, %s32
      %s44 = scalar_select %p41, %s43, %s32
      %p45 = scmp.ge.s32.totalorder %s44, 1
      %s46 = scalar_select %p45, 0, %s44
      %s47 = sadd.s32 1, %s31
      %s48 = scalar_select %p45, %s47, %s31
      %p49 = scmp.ge.s32.totalorder %s48, 2
      %s50 = scalar_select %p49, 0, %s48
      %s51 = ssub.s32 1, %s31
      %s52 = smul.u32 %s32, %s51
      %s53 = smul.u32 %s33, %s51
      %s54 = ssub.s32 1, %s50
      %s55 = smul.u32 %s46, %s54
      %s56 = smul.u32 %s42, %s54
      %s57 = ssub.s32 %s52, %s55
      %s58 = ssub.s32 %s53, %s56
      %s59 = sor.u32 %s57, %s58
      %p60 = scmp.eq.s32.totalorder %s59, 0
      %s62 = sadd.s32 %s61, 1
      %s63 = scalar_select %p60, %s61, %s62
      %p66 = pneg %p60
      %p67 = scmp.eq.s32.totalorder %s24, 1
      %p68 = por %p66, %p67
      %p69 = scmp.ne.s32.totalorder %s61, %s64
      %p70 = scmp.eq.s32.totalorder %s24, 0
      %p71 = por %p69, %p70
      %p72 = scmp.ne.s32.totalorder %s61, %s64
      %p73 = scmp.eq.s32.totalorder %s29, 1
      %p74 = por %p72, %p73
      %p75 = scmp.ne.s32.totalorder %s64, %s65
      %p76 = scmp.eq.s32.totalorder %s29, 0
      %p77 = por %p75, %p76
      %p78 = scmp.ne.s32.totalorder %s64, %s65
      %p79 = scmp.eq.s32.totalorder %s30, 1
      %p80 = por %p78, %p79
      %p82 = scmp.ne.s32.totalorder %s65, %s81
      %p83 = scmp.eq.s32.totalorder %s30, 0
      %p84 = por %p82, %p83
      %s85 = smul.u32 %s32, %s31
      %s86 = smul.u32 %s33, %s31
      %s87 = smul.u32 %s46, %s50
      %s88 = smul.u32 %s42, %s50
      %s89 = ssub.s32 %s85, %s87
      %s90 = ssub.s32 %s86, %s88
      %s91 = sor.u32 %s89, %s90
      %p92 = scmp.eq.s32.totalorder %s91, 0
      %s94 = sadd.s32 %s93, 1
      %s95 = scalar_select %p92, %s93, %s94
      %p98 = pneg %p92
      %p99 = scmp.eq.s32.totalorder %s24, 1
      %p100 = por %p98, %p99
      %p101 = scmp.ne.s32.totalorder %s93, %s96
      %p102 = scmp.eq.s32.totalorder %s24, 0
      %p103 = por %p101, %p102
      %p104 = scmp.ne.s32.totalorder %s93, %s96
      %p105 = scmp.eq.s32.totalorder %s29, 1
      %p106 = por %p104, %p105
      %p107 = scmp.ne.s32.totalorder %s96, %s97
      %p108 = scmp.eq.s32.totalorder %s29, 0
      %p109 = por %p107, %p108
      %p110 = scmp.ne.s32.totalorder %s96, %s97
      %p111 = scmp.eq.s32.totalorder %s30, 1
      %p112 = por %p110, %p111
      %p114 = scmp.ne.s32.totalorder %s97, %s113
      %p115 = scmp.eq.s32.totalorder %s30, 0
      %p116 = por %p114, %p115
      %s117 = ssub.s32 %s33, %s42
      %p118 = scmp.eq.s32.totalorder %s117, 0
      %s120 = sadd.s32 %s119, 1
      %s121 = scalar_select %p118, %s119, %s120
      %p124 = pneg %p118
      %p125 = scmp.eq.s32.totalorder %s24, 1
      %p126 = por %p124, %p125
      %p127 = scmp.ne.s32.totalorder %s119, %s122
      %p128 = scmp.eq.s32.totalorder %s24, 0
      %p129 = por %p127, %p128
      %p130 = scmp.ne.s32.totalorder %s119, %s122
      %p131 = scmp.eq.s32.totalorder %s29, 1
      %p132 = por %p130, %p131
      %p133 = scmp.ne.s32.totalorder %s122, %s123
      %p134 = scmp.eq.s32.totalorder %s29, 0
      %p135 = por %p133, %p134
      %p136 = scmp.ne.s32.totalorder %s122, %s123
      %p137 = scmp.eq.s32.totalorder %s30, 1
      %p138 = por %p136, %p137
      %p140 = scmp.ne.s32.totalorder %s123, %s139
      %p141 = scmp.eq.s32.totalorder %s30, 0
      %p142 = por %p140, %p141
      %s144 = sadd.s32 %s143, 1
      %p147 = scmp.eq.s32.totalorder %s24, 1
      %p148 = scmp.ne.s32.totalorder %s143, %s145
      %p149 = scmp.eq.s32.totalorder %s24, 0
      %p150 = por %p148, %p149
      %p151 = scmp.ne.s32.totalorder %s143, %s145
      %p152 = scmp.eq.s32.totalorder %s29, 1
      %p153 = por %p151, %p152
      %p154 = scmp.ne.s32.totalorder %s145, %s146
      %p155 = scmp.eq.s32.totalorder %s29, 0
      %p156 = por %p154, %p155
      %p157 = scmp.ne.s32.totalorder %s145, %s146
      %p158 = scmp.eq.s32.totalorder %s30, 1
      %p159 = por %p157, %p158
      %p161 = scmp.ne.s32.totalorder %s146, %s160
      %p162 = scmp.eq.s32.totalorder %s30, 0
      %p163 = por %p161, %p162
      %s164 = ssub.s32 %s31, %s50
      %p165 = scmp.eq.s32.totalorder %s164, 0
      %s167 = sadd.s32 %s166, 1
      %s168 = scalar_select %p165, %s166, %s167
      %p171 = pneg %p165
      %p172 = scmp.eq.s32.totalorder %s24, 1
      %p173 = por %p171, %p172
      %p174 = scmp.ne.s32.totalorder %s166, %s169
      %p175 = scmp.eq.s32.totalorder %s24, 0
      %p176 = por %p174, %p175
      %p177 = scmp.ne.s32.totalorder %s166, %s169
      %p178 = scmp.eq.s32.totalorder %s29, 1
      %p179 = por %p177, %p178
      %p180 = scmp.ne.s32.totalorder %s169, %s170
      %p181 = scmp.eq.s32.totalorder %s29, 0
      %p182 = por %p180, %p181
      %p183 = scmp.ne.s32.totalorder %s169, %s170
      %p184 = scmp.eq.s32.totalorder %s30, 1
      %p185 = por %p183, %p184
      %p187 = scmp.ne.s32.totalorder %s170, %s186
      %p188 = scmp.eq.s32.totalorder %s30, 0
      %p189 = por %p187, %p188
      %s190 = ssub.s32 %s31, %s50
      %p191 = scmp.eq.s32.totalorder %s190, 0
      %s193 = sadd.s32 %s192, 1
      %s194 = scalar_select %p191, %s192, %s193
      %p197 = pneg %p191
      %p198 = scmp.eq.s32.totalorder %s24, 1
      %p199 = por %p197, %p198
      %p200 = scmp.ne.s32.totalorder %s192, %s195
      %p201 = scmp.eq.s32.totalorder %s24, 0
      %p202 = por %p200, %p201
      %p203 = scmp.ne.s32.totalorder %s192, %s195
      %p204 = scmp.eq.s32.totalorder %s29, 1
      %p205 = por %p203, %p204
      %p206 = scmp.ne.s32.totalorder %s195, %s196
      %p207 = scmp.eq.s32.totalorder %s29, 0
      %p208 = por %p206, %p207
      %p209 = scmp.ne.s32.totalorder %s195, %s196
      %p210 = scmp.eq.s32.totalorder %s30, 1
      %p211 = por %p209, %p210
      %p213 = scmp.ne.s32.totalorder %s196, %s212
      %p214 = scmp.eq.s32.totalorder %s30, 0
      %p215 = por %p213, %p214
      %p216 = scmp.le.s32.totalorder 1, %s24
      %p217 = scmp.lt.s32.totalorder %s24, 3
      %p218 = pnand %p216, %p217
      %p219 = pneg %p218
      // Predicated region
      $region9: #{tpu_custom_call.1} parent=5 // pred_check
        _
      $region10: #{tpu_custom_call.1} parent=5 // pred_check_branch
        %221 = sbr.rel (%p218) target = $region12
      $region11: #{tpu_custom_call.1} parent=5 // pred_region
        %s222 = ssub.s32 %s24, 1
        // Predicated region
        $region13: #{tpu_custom_call.1} parent=11 // pred_check
          %p223 = pneg %p135
        $region14: #{tpu_custom_call.1} parent=11 // pred_check_branch
          %225 = sbr.rel (%p223) target = $region16
        $region15: #{tpu_custom_call.1} parent=11 // pred_region
          %227 = vsyncadd [#allocation7], 0
          %s228 = smul.addr %s36, 2
          %s229 = scalar_lea.hbm %s2, %s228
          %s231 = sshll.u32 %s229, 4
          %s232 = int_to_ptr.hbm [resolvable:$true] %s231
          %s233 = sshll.u32 [#allocation8], 4
          %s234 = int_to_ptr.vmem [resolvable:$true] %s233
          %236 = dma.hbm_to_vmem [thread:$0]  %s232, 32, %s234, [#allocation7]
        $region16: #{tpu_custom_call.1} parent=11 // pred_fallthru
          _
        // Predicated region
        $region17: #{tpu_custom_call.1} parent=11 // pred_check
          %p237 = pneg %p156
        $region18: #{tpu_custom_call.1} parent=11 // pred_check_branch
          %239 = sbr.rel (%p237) target = $region20
        $region19: #{tpu_custom_call.1} parent=11 // pred_region
          _
        $region20: #{tpu_custom_call.1} parent=11 // pred_fallthru
          _
      $region12: #{tpu_custom_call.1} parent=5 // pred_fallthru
        _
      %p240 = scmp.lt.s32.totalorder %s24, 2
      // Predicated region
      $region21: #{tpu_custom_call.1} parent=5 // pred_check
        %p241 = pneg %p240
      $region22: #{tpu_custom_call.1} parent=5 // pred_check_branch
        %243 = sbr.rel (%p241) target = $region24
      $region23: #{tpu_custom_call.1} parent=5 // pred_region
        // Predicated region
        $region25: #{tpu_custom_call.1} parent=23 // pred_check
          %p244 = pneg %p71
        $region26: #{tpu_custom_call.1} parent=23 // pred_check_branch
          %246 = sbr.rel (%p244) target = $region28
        $region27: #{tpu_custom_call.1} parent=23 // pred_region
          %s247 = sand.u32 %s61, 1
          %s248 = scalar_lea.sflag [#allocation4], %s247
          %s249 = sand.u32 %s61, 1
          %s250 = smul.addr %s249, 128
          %s251 = scalar_lea.vmem [#allocation3], %s250
          %s252 = ssub.s32 1, %s31
          %s253 = smul.u32 %s32, %s252
          %s254 = smul.u32 %s33, %s252
          %s255 = smul.u32 16, %s253
          %257 = vsyncadd %s248, 0
          %s258 = smul.addr %s254, 2
          %s259 = smul.addr %s255, 2
          %s260 = sadd.s32 %s258, %s259
          %s261 = smul.addr %s260, 4
          %s262 = scalar_lea.hbm %s0, %s261
          %s263 = sshll.u32 %s262, 4
          %s264 = int_to_ptr.hbm [resolvable:$true] %s263
          %s265 = sshll.u32 %s251, 4
          %s266 = int_to_ptr.vmem [resolvable:$true] %s265
          %271 = dma.hbm_to_vmem [thread:$0]  %s264, 2048, %s266, %s248, 128, 128, 8
        $region28: #{tpu_custom_call.1} parent=23 // pred_fallthru
          _
        // Predicated region
        $region29: #{tpu_custom_call.1} parent=23 // pred_check
          %p272 = pneg %p103
        $region30: #{tpu_custom_call.1} parent=23 // pred_check_branch
          %274 = sbr.rel (%p272) target = $region32
        $region31: #{tpu_custom_call.1} parent=23 // pred_region
          %s275 = sand.u32 %s24, 1
          %s276 = scalar_lea.sflag [#allocation7], %s275
          %s277 = sand.u32 %s93, 1
          %s278 = smul.addr %s277, 128
          %s279 = scalar_lea.vmem [#allocation6], %s278
          %s280 = smul.u32 %s32, %s31
          %s281 = smul.u32 %s33, %s31
          %s282 = smul.u32 16, %s280
          %284 = vsyncadd %s276, 0
          %s285 = smul.addr %s281, 2
          %s286 = smul.addr %s282, 2
          %s287 = sadd.s32 %s285, %s286
          %s288 = smul.addr %s287, 4
          %s289 = scalar_lea.hbm %s1, %s288
          %s290 = sshll.u32 %s289, 4
          %s291 = int_to_ptr.hbm [resolvable:$true] %s290
          %s292 = sshll.u32 %s279, 4
          %s293 = int_to_ptr.vmem [resolvable:$true] %s292
          %298 = dma.hbm_to_vmem [thread:$0]  %s291, 2048, %s293, %s276, 128, 128, 8
        $region32: #{tpu_custom_call.1} parent=23 // pred_fallthru
          _
      $region24: #{tpu_custom_call.1} parent=5 // pred_fallthru
        _
      %p299 = scmp.le.s32.totalorder 1, %s24
      %p300 = scmp.lt.s32.totalorder %s24, 3
      %p301 = pnand %p299, %p300
      %p302 = pneg %p301
      // Predicated region
      $region33: #{tpu_custom_call.1} parent=5 // pred_check
        _
      $region34: #{tpu_custom_call.1} parent=5 // pred_check_branch
        %304 = sbr.rel (%p301) target = $region36
      $region35: #{tpu_custom_call.1} parent=5 // pred_region
        %s305 = ssub.s32 %s24, 1
        %s306 = sand.u32 %s64, 1
        %s307 = scalar_lea.sflag [#allocation4], %s306
        %s308 = sand.u32 %s64, 1
        %s309 = smul.addr %s308, 128
        %s310 = scalar_lea.vmem [#allocation3], %s309
        // Predicated region
        $region37: #{tpu_custom_call.1} parent=35 // pred_check
          %p311 = pneg %p77
        $region38: #{tpu_custom_call.1} parent=35 // pred_check_branch
          %313 = sbr.rel (%p311) target = $region40
        $region39: #{tpu_custom_call.1} parent=35 // pred_region
          %315 = dma.done %s307, 2048
        $region40: #{tpu_custom_call.1} parent=35 // pred_fallthru
          _
        %s316 = sand.u32 %s29, 1
        %s317 = scalar_lea.sflag [#allocation7], %s316
        %s318 = sand.u32 %s96, 1
        %s319 = smul.addr %s318, 128
        %s320 = scalar_lea.vmem [#allocation6], %s319
        // Predicated region
        $region41: #{tpu_custom_call.1} parent=35 // pred_check
          %p321 = pneg %p109
        $region42: #{tpu_custom_call.1} parent=35 // pred_check_branch
          %323 = sbr.rel (%p321) target = $region44
        $region43: #{tpu_custom_call.1} parent=35 // pred_region
          %325 = dma.done %s317, 2048
        $region44: #{tpu_custom_call.1} parent=35 // pred_fallthru
          _
        // Predicated region
        $region45: #{tpu_custom_call.1} parent=35 // pred_check
          %p326 = pneg %p135
        $region46: #{tpu_custom_call.1} parent=35 // pred_check_branch
          %328 = sbr.rel (%p326) target = $region48
        $region47: #{tpu_custom_call.1} parent=35 // pred_region
          %330 = dma.done [#allocation7], 32
        $region48: #{tpu_custom_call.1} parent=35 // pred_fallthru
          _
        %s331 = sand.u32 %s64, 1
        %s332 = scalar_lea.sflag [#allocation4], %s331
        %s333 = sand.u32 %s64, 1
        %s334 = smul.addr %s333, 128
        %s335 = scalar_lea.vmem [#allocation3], %s334
        %p336 = pneg %p77
        %p337 = pneg %p74
        %s338 = sand.u32 %s29, 1
        %s339 = scalar_lea.sflag [#allocation7], %s338
        %s340 = sand.u32 %s96, 1
        %s341 = smul.addr %s340, 128
        %s342 = scalar_lea.vmem [#allocation6], %s341
        %p343 = pneg %p109
        %p344 = pneg %p106
        %p345 = pneg %p135
        %p346 = pneg %p132
        %p347 = pneg %p156
        %p348 = pneg %p153
        %p349 = pneg %p182
        %p350 = pneg %p179
        %s351 = sand.u32 %s169, 1
        %s352 = scalar_lea.sflag [#allocation5], %s351
        %s353 = sand.u32 %s169, 1
        %s354 = scalar_lea.vmem [#allocation9], %s353
        %p355 = pneg %p208
        %p356 = pneg %p205
        %s357 = sand.u32 %s195, 1
        %s358 = scalar_lea.sflag [#allocation11], %s357
        %s359 = sand.u32 %s195, 1
        %s360 = smul.addr %s359, 128
        %s361 = scalar_lea.vmem [#allocation10], %s360
        %s362 = ssub.s32 1, %s34
        %s363 = smul.u32 %s35, %s362
        %s364 = smul.u32 %s36, %s362
        %s365 = smul.u32 16, %s363
        %s366 = smul.u32 %s35, %s34
        %s367 = smul.u32 %s36, %s34
        %s368 = smul.u32 16, %s366
        %p370 = scmp.eq.s32.totalorder %s35, 0
        %p371 = scmp.eq.s32.totalorder %s36, 0
        %p372 = pnand %p370, %p371
        %p373 = pneg %p372
        // Predicated region
        $region49: #{tpu_custom_call.1} parent=35 // pred_check
          _
        $region50: #{tpu_custom_call.1} parent=35 // pred_check_branch
          %375 = sbr.rel (%p372) target = $region52
        $region51: #{tpu_custom_call.1} parent=35 // pred_region
          %376 = vst [vmem:[%s354] sm:$0x1] 0.0
          %377 = vst [vmem:[%s361] sm:$0xff] 0.0
          %378 = vst [vmem:[%s361 + $0x8] sm:$0xff] 0.0
          %379 = vst [vmem:[%s361 + $0x10] sm:$0xff] 0.0
          %380 = vst [vmem:[%s361 + $0x18] sm:$0xff] 0.0
          %381 = vst [vmem:[%s361 + $0x20] sm:$0xff] 0.0
          %382 = vst [vmem:[%s361 + $0x28] sm:$0xff] 0.0
          %383 = vst [vmem:[%s361 + $0x30] sm:$0xff] 0.0
          %384 = vst [vmem:[%s361 + $0x38] sm:$0xff] 0.0
          %385 = vst [vmem:[%s361 + $0x40] sm:$0xff] 0.0
          %386 = vst [vmem:[%s361 + $0x48] sm:$0xff] 0.0
          %387 = vst [vmem:[%s361 + $0x50] sm:$0xff] 0.0
          %388 = vst [vmem:[%s361 + $0x58] sm:$0xff] 0.0
          %389 = vst [vmem:[%s361 + $0x60] sm:$0xff] 0.0
          %390 = vst [vmem:[%s361 + $0x68] sm:$0xff] 0.0
          %391 = vst [vmem:[%s361 + $0x70] sm:$0xff] 0.0
          %392 = vst [vmem:[%s361 + $0x78] sm:$0xff] 0.0
        $region52: #{tpu_custom_call.1} parent=35 // pred_fallthru
          _
        // Predicated region
        $region53: #{tpu_custom_call.1} parent=35 // pred_check
          %p393 = pneg %p371
        $region54: #{tpu_custom_call.1} parent=35 // pred_check_branch
          %395 = sbr.rel (%p393) target = $region56
        $region55: #{tpu_custom_call.1} parent=35 // pred_region
          %396 = vst [vmem:[#allocation2] sm:$0xff] 0.0
          %397 = vst [vmem:[#allocation2 + $0x8] sm:$0xff] 0.0
        $region56: #{tpu_custom_call.1} parent=35 // pred_fallthru
          _
        %p398 = scmp.eq.s32.totalorder %s34, 0
        %v399 = vld [vmem:[%s310] sm:$0xff]
        %v400 = vld [vmem:[%s310 + $0x8] sm:$0xff]
        %v401 = vld [vmem:[%s310 + $0x10] sm:$0xff]
        %v402 = vld [vmem:[%s310 + $0x18] sm:$0xff]
        %v403 = vld [vmem:[%s310 + $0x20] sm:$0xff]
        %v404 = vld [vmem:[%s310 + $0x28] sm:$0xff]
        %v405 = vld [vmem:[%s310 + $0x30] sm:$0xff]
        %v406 = vld [vmem:[%s310 + $0x38] sm:$0xff]
        %v407 = vld [vmem:[%s310 + $0x40] sm:$0xff]
        %v408 = vld [vmem:[%s310 + $0x48] sm:$0xff]
        %v409 = vld [vmem:[%s310 + $0x50] sm:$0xff]
        %v410 = vld [vmem:[%s310 + $0x58] sm:$0xff]
        %v411 = vld [vmem:[%s310 + $0x60] sm:$0xff]
        %v412 = vld [vmem:[%s310 + $0x68] sm:$0xff]
        %v413 = vld [vmem:[%s310 + $0x70] sm:$0xff]
        %v414 = vld [vmem:[%s310 + $0x78] sm:$0xff]
        %v415 = vld [vmem:[%s320] sm:$0xff]
        %v416 = vld [vmem:[%s320 + $0x8] sm:$0xff]
        %v417 = vld [vmem:[%s320 + $0x10] sm:$0xff]
        %v418 = vld [vmem:[%s320 + $0x18] sm:$0xff]
        %v419 = vld [vmem:[%s320 + $0x20] sm:$0xff]
        %v420 = vld [vmem:[%s320 + $0x28] sm:$0xff]
        %v421 = vld [vmem:[%s320 + $0x30] sm:$0xff]
        %v422 = vld [vmem:[%s320 + $0x38] sm:$0xff]
        %v423 = vld [vmem:[%s320 + $0x40] sm:$0xff]
        %v424 = vld [vmem:[%s320 + $0x48] sm:$0xff]
        %v425 = vld [vmem:[%s320 + $0x50] sm:$0xff]
        %v426 = vld [vmem:[%s320 + $0x58] sm:$0xff]
        %v427 = vld [vmem:[%s320 + $0x60] sm:$0xff]
        %v428 = vld [vmem:[%s320 + $0x68] sm:$0xff]
        %v429 = vld [vmem:[%s320 + $0x70] sm:$0xff]
        %v430 = vld [vmem:[%s320 + $0x78] sm:$0xff]
        %s431 = scalar_select %p398, 1, 0
        %v432 = vstv %s431
        %vm433 = vcmp.eq.s32.totalorder %v432, 1
        %v434 = vsel %vm433, %v399, %v415
        %v435 = vsel %vm433, %v400, %v416
        %v436 = vsel %vm433, %v401, %v417
        %v437 = vsel %vm433, %v402, %v418
        %v438 = vsel %vm433, %v403, %v419
        %v439 = vsel %vm433, %v404, %v420
        %v440 = vsel %vm433, %v405, %v421
        %v441 = vsel %vm433, %v406, %v422
        %v442 = vsel %vm433, %v407, %v423
        %v443 = vsel %vm433, %v408, %v424
        %v444 = vsel %vm433, %v409, %v425
        %v445 = vsel %vm433, %v410, %v426
        %v446 = vsel %vm433, %v411, %v427
        %v447 = vsel %vm433, %v412, %v428
        %v448 = vsel %vm433, %v413, %v429
        %v449 = vsel %vm433, %v414, %v430
        %466 = vst [vmem:[#allocation1] ss:$2 sm:$0xff] %v434
        %v467 = vld.sshfl [vmem:[#allocation1] sm:$0xff pattern:$0x75316420]
        %v468 = vld.sshfl [vmem:[#allocation1 + $0x8] sm:$0xff pattern:$0x75316420]
        %s469 = scalar_lea.vmem [#allocation1], 16
        %470 = vst [vmem:[%s469] ss:$2 sm:$0xff] %v435
        %v471 = vld.sshfl [vmem:[#allocation1 + $0x10] sm:$0xff pattern:$0x75316420]
        %v472 = vld.sshfl [vmem:[#allocation1 + $0x18] sm:$0xff pattern:$0x75316420]
        %s473 = scalar_lea.vmem [#allocation1], 32
        %474 = vst [vmem:[%s473] ss:$2 sm:$0xff] %v436
        %v475 = vld.sshfl [vmem:[#allocation1 + $0x20] sm:$0xff pattern:$0x75316420]
        %v476 = vld.sshfl [vmem:[#allocation1 + $0x28] sm:$0xff pattern:$0x75316420]
        %s477 = scalar_lea.vmem [#allocation1], 48
        %478 = vst [vmem:[%s477] ss:$2 sm:$0xff] %v437
        %v479 = vld.sshfl [vmem:[#allocation1 + $0x30] sm:$0xff pattern:$0x75316420]
        %v480 = vld.sshfl [vmem:[#allocation1 + $0x38] sm:$0xff pattern:$0x75316420]
        %481 = vst [vmem:[#allocation1] ss:$2 sm:$0xff] %v438
        %v482 = vld.sshfl [vmem:[#allocation1] sm:$0xff pattern:$0x75316420]
        %v483 = vld.sshfl [vmem:[#allocation1 + $0x8] sm:$0xff pattern:$0x75316420]
        %484 = vst [vmem:[%s469] ss:$2 sm:$0xff] %v439
        %v485 = vld.sshfl [vmem:[#allocation1 + $0x10] sm:$0xff pattern:$0x75316420]
        %v486 = vld.sshfl [vmem:[#allocation1 + $0x18] sm:$0xff pattern:$0x75316420]
        %487 = vst [vmem:[%s473] ss:$2 sm:$0xff] %v440
        %v488 = vld.sshfl [vmem:[#allocation1 + $0x20] sm:$0xff pattern:$0x75316420]
        %v489 = vld.sshfl [vmem:[#allocation1 + $0x28] sm:$0xff pattern:$0x75316420]
        %490 = vst [vmem:[%s477] ss:$2 sm:$0xff] %v441
        %v491 = vld.sshfl [vmem:[#allocation1 + $0x30] sm:$0xff pattern:$0x75316420]
        %v492 = vld.sshfl [vmem:[#allocation1 + $0x38] sm:$0xff pattern:$0x75316420]
        %493 = vst [vmem:[#allocation1] ss:$2 sm:$0xff] %v442
        %v494 = vld.sshfl [vmem:[#allocation1] sm:$0xff pattern:$0x75316420]
        %v495 = vld.sshfl [vmem:[#allocation1 + $0x8] sm:$0xff pattern:$0x75316420]
        %496 = vst [vmem:[%s469] ss:$2 sm:$0xff] %v443
        %v497 = vld.sshfl [vmem:[#allocation1 + $0x10] sm:$0xff pattern:$0x75316420]
        %v498 = vld.sshfl [vmem:[#allocation1 + $0x18] sm:$0xff pattern:$0x75316420]
        %499 = vst [vmem:[%s473] ss:$2 sm:$0xff] %v444
        %v500 = vld.sshfl [vmem:[#allocation1 + $0x20] sm:$0xff pattern:$0x75316420]
        %v501 = vld.sshfl [vmem:[#allocation1 + $0x28] sm:$0xff pattern:$0x75316420]
        %502 = vst [vmem:[%s477] ss:$2 sm:$0xff] %v445
        %v503 = vld.sshfl [vmem:[#allocation1 + $0x30] sm:$0xff pattern:$0x75316420]
        %v504 = vld.sshfl [vmem:[#allocation1 + $0x38] sm:$0xff pattern:$0x75316420]
        %505 = vst [vmem:[#allocation1] ss:$2 sm:$0xff] %v446
        %v506 = vld.sshfl [vmem:[#allocation1] sm:$0xff pattern:$0x75316420]
        %v507 = vld.sshfl [vmem:[#allocation1 + $0x8] sm:$0xff pattern:$0x75316420]
        %508 = vst [vmem:[%s469] ss:$2 sm:$0xff] %v447
        %v509 = vld.sshfl [vmem:[#allocation1 + $0x10] sm:$0xff pattern:$0x75316420]
        %v510 = vld.sshfl [vmem:[#allocation1 + $0x18] sm:$0xff pattern:$0x75316420]
        %511 = vst [vmem:[%s473] ss:$2 sm:$0xff] %v448
        %v512 = vld.sshfl [vmem:[#allocation1 + $0x20] sm:$0xff pattern:$0x75316420]
        %v513 = vld.sshfl [vmem:[#allocation1 + $0x28] sm:$0xff pattern:$0x75316420]
        %514 = vst [vmem:[%s477] ss:$2 sm:$0xff] %v449
        %v515 = vld.sshfl [vmem:[#allocation1 + $0x30] sm:$0xff pattern:$0x75316420]
        %v516 = vld.sshfl [vmem:[#allocation1 + $0x38] sm:$0xff pattern:$0x75316420]
        %vm549 = vcmask 1043456
        %v550 = vsel %vm549, %v467, 0.0
        %v551 = vsel %vm549, %v468, 0.0
        %v552 = vadd.f32 %v550, %v551
        %553 = vadd.xlane.f32.xlu0 %v552
        %v554 = vpop.xlane.xlu0 %553
        %v555 = vsel %vm549, %v471, 0.0
        %v556 = vsel %vm549, %v472, 0.0
        %v557 = vadd.f32 %v555, %v556
        %558 = vadd.xlane.f32.xlu0 %v557
        %v559 = vpop.xlane.xlu0 %558
        %v560 = vsel %vm549, %v475, 0.0
        %v561 = vsel %vm549, %v476, 0.0
        %v562 = vadd.f32 %v560, %v561
        %563 = vadd.xlane.f32.xlu0 %v562
        %v564 = vpop.xlane.xlu0 %563
        %v565 = vsel %vm549, %v479, 0.0
        %v566 = vsel %vm549, %v480, 0.0
        %v567 = vadd.f32 %v565, %v566
        %568 = vadd.xlane.f32.xlu0 %v567
        %v569 = vpop.xlane.xlu0 %568
        %v570 = vsel %vm549, %v482, 0.0
        %v571 = vsel %vm549, %v483, 0.0
        %v572 = vadd.f32 %v570, %v571
        %573 = vadd.xlane.f32.xlu0 %v572
        %v574 = vpop.xlane.xlu0 %573
        %v575 = vsel %vm549, %v485, 0.0
        %v576 = vsel %vm549, %v486, 0.0
        %v577 = vadd.f32 %v575, %v576
        %578 = vadd.xlane.f32.xlu0 %v577
        %v579 = vpop.xlane.xlu0 %578
        %v580 = vsel %vm549, %v488, 0.0
        %v581 = vsel %vm549, %v489, 0.0
        %v582 = vadd.f32 %v580, %v581
        %583 = vadd.xlane.f32.xlu0 %v582
        %v584 = vpop.xlane.xlu0 %583
        %v585 = vsel %vm549, %v491, 0.0
        %v586 = vsel %vm549, %v492, 0.0
        %v587 = vadd.f32 %v585, %v586
        %588 = vadd.xlane.f32.xlu0 %v587
        %v589 = vpop.xlane.xlu0 %588
        %v590 = vsel %vm549, %v494, 0.0
        %v591 = vsel %vm549, %v495, 0.0
        %v592 = vadd.f32 %v590, %v591
        %593 = vadd.xlane.f32.xlu0 %v592
        %v594 = vpop.xlane.xlu0 %593
        %v595 = vsel %vm549, %v497, 0.0
        %v596 = vsel %vm549, %v498, 0.0
        %v597 = vadd.f32 %v595, %v596
        %598 = vadd.xlane.f32.xlu0 %v597
        %v599 = vpop.xlane.xlu0 %598
        %v600 = vsel %vm549, %v500, 0.0
        %v601 = vsel %vm549, %v501, 0.0
        %v602 = vadd.f32 %v600, %v601
        %603 = vadd.xlane.f32.xlu0 %v602
        %v604 = vpop.xlane.xlu0 %603
        %v605 = vsel %vm549, %v503, 0.0
        %v606 = vsel %vm549, %v504, 0.0
        %v607 = vadd.f32 %v605, %v606
        %608 = vadd.xlane.f32.xlu0 %v607
        %v609 = vpop.xlane.xlu0 %608
        %v610 = vsel %vm549, %v506, 0.0
        %v611 = vsel %vm549, %v507, 0.0
        %v612 = vadd.f32 %v610, %v611
        %613 = vadd.xlane.f32.xlu0 %v612
        %v614 = vpop.xlane.xlu0 %613
        %v615 = vsel %vm549, %v509, 0.0
        %v616 = vsel %vm549, %v510, 0.0
        %v617 = vadd.f32 %v615, %v616
        %618 = vadd.xlane.f32.xlu0 %v617
        %v619 = vpop.xlane.xlu0 %618
        %v620 = vsel %vm549, %v512, 0.0
        %v621 = vsel %vm549, %v513, 0.0
        %v622 = vadd.f32 %v620, %v621
        %623 = vadd.xlane.f32.xlu0 %v622
        %v624 = vpop.xlane.xlu0 %623
        %v625 = vsel %vm549, %v515, 0.0
        %v626 = vsel %vm549, %v516, 0.0
        %v627 = vadd.f32 %v625, %v626
        %628 = vadd.xlane.f32.xlu0 %v627
        %v629 = vpop.xlane.xlu0 %628
        %v630 = vmul.f32 %v554, 0.00390625
        %v631 = vmul.f32 %v559, 0.00390625
        %v632 = vmul.f32 %v564, 0.00390625
        %v633 = vmul.f32 %v569, 0.00390625
        %v634 = vmul.f32 %v574, 0.00390625
        %v635 = vmul.f32 %v579, 0.00390625
        %v636 = vmul.f32 %v584, 0.00390625
        %v637 = vmul.f32 %v589, 0.00390625
        %v638 = vmul.f32 %v594, 0.00390625
        %v639 = vmul.f32 %v599, 0.00390625
        %v640 = vmul.f32 %v604, 0.00390625
        %v641 = vmul.f32 %v609, 0.00390625
        %v642 = vmul.f32 %v614, 0.00390625
        %v643 = vmul.f32 %v619, 0.00390625
        %v644 = vmul.f32 %v624, 0.00390625
        %v645 = vmul.f32 %v629, 0.00390625
        %v646 = vld [vmem:[#allocation2] sm:$0xff]
        %v647 = vld [vmem:[#allocation2 + $0x8] sm:$0xff]
        %v648 = vpack.c.bf16 %v630, %v630
        %v649 = vpack.c.bf16 %v631, %v631
        %v650 = vpack.c.bf16 %v632, %v632
        %v651 = vpack.c.bf16 %v633, %v633
        %v652 = vpack.c.bf16 %v634, %v634
        %v653 = vpack.c.bf16 %v635, %v635
        %v654 = vpack.c.bf16 %v636, %v636
        %v655 = vpack.c.bf16 %v637, %v637
        %v656 = vpack.c.bf16 %v638, %v638
        %v657 = vpack.c.bf16 %v639, %v639
        %v658 = vpack.c.bf16 %v640, %v640
        %v659 = vpack.c.bf16 %v641, %v641
        %v660 = vpack.c.bf16 %v642, %v642
        %v661 = vpack.c.bf16 %v643, %v643
        %v662 = vpack.c.bf16 %v644, %v644
        %v663 = vpack.c.bf16 %v645, %v645
        %v664 = vld [vmem:[#allocation8] sm:$0x3]
        %v681 = vunpack.c.l.b16 %v648
        %v682 = vunpack.c.l.b16 %v649
        %v683 = vunpack.c.l.b16 %v650
        %v684 = vunpack.c.l.b16 %v651
        %v685 = vunpack.c.l.b16 %v652
        %v686 = vunpack.c.l.b16 %v653
        %v687 = vunpack.c.l.b16 %v654
        %v688 = vunpack.c.l.b16 %v655
        %v689 = vunpack.c.l.b16 %v656
        %v690 = vunpack.c.l.b16 %v657
        %v691 = vunpack.c.l.b16 %v658
        %v692 = vunpack.c.l.b16 %v659
        %v693 = vunpack.c.l.b16 %v660
        %v694 = vunpack.c.l.b16 %v661
        %v695 = vunpack.c.l.b16 %v662
        %v696 = vunpack.c.l.b16 %v663
        %v697 = vlaneseq
        %v698 = vand.u32 %v697, 127
        %v699 = vperm.slane %v681, %v698
        %v700 = vperm.slane %v682, %v698
        %v701 = vperm.slane %v683, %v698
        %v702 = vperm.slane %v684, %v698
        %v703 = vperm.slane %v685, %v698
        %v704 = vperm.slane %v686, %v698
        %v705 = vperm.slane %v687, %v698
        %v706 = vperm.slane %v688, %v698
        %v707 = vperm.slane %v689, %v698
        %v708 = vperm.slane %v690, %v698
        %v709 = vperm.slane %v691, %v698
        %v710 = vperm.slane %v692, %v698
        %v711 = vperm.slane %v693, %v698
        %v712 = vperm.slane %v694, %v698
        %v713 = vperm.slane %v695, %v698
        %v714 = vperm.slane %v696, %v698
        %vm715 = vcmask 1041409
        %v716 = vsel %vm715, %v700, %v699
        %vm717 = vcmask 1042434
        %v718 = vsel %vm717, %v701, %v716
        %vm719 = vcmask 1043459
        %v720 = vsel %vm719, %v702, %v718
        %vm721 = vcmask 1044484
        %v722 = vsel %vm721, %v703, %v720
        %vm723 = vcmask 1045509
        %v724 = vsel %vm723, %v704, %v722
        %vm725 = vcmask 1046534
        %v726 = vsel %vm725, %v705, %v724
        %vm727 = vcmask 1047559
        %v728 = vsel %vm727, %v706, %v726
        %v729 = vsel %vm715, %v708, %v707
        %v730 = vsel %vm717, %v709, %v729
        %v731 = vsel %vm719, %v710, %v730
        %v732 = vsel %vm721, %v711, %v731
        %v733 = vsel %vm723, %v712, %v732
        %v734 = vsel %vm725, %v713, %v733
        %v735 = vsel %vm727, %v714, %v734
        %v736 = vpack.c.b16 %v735, %v728
        %vm737 = vcmask 31744
        %v739 = vsel %vm737, %v736, 0
        %vm741 = vcmask 1041408
        %v743 = vsel %vm741, %v664, 0
        %745 = vmatpush.bf16.msra.mxu0 0
        %746 = vmatpush.bf16.msra.mxu0 0
        %747 = vmatpush.bf16.msra.mxu0 0
        %748 = vmatpush.bf16.msra.mxu0 0
        %749 = vmatpush.bf16.msra.mxu0 0
        %750 = vmatpush.bf16.msra.mxu0 0
        %751 = vmatpush.bf16.msra.mxu0 0
        %752 = vmatpush.bf16.msra.mxu0 %v743
        %753 = vmatmul.bf16.gmra.mxu0 %v739
        %v754 = vpop.f32.mrf.mxu0
        %v755 = vadd.f32 0.0, %v754
        %v756 = vpop.f32.mrf.mxu0
        %v757 = vadd.f32 0.0, %v756
        %758 = vdwg.mxu0
        %v759 = vadd.f32 %v646, %v755
        %v760 = vadd.f32 %v647, %v757
        %761 = vst [vmem:[#allocation2] sm:$0xff] %v759
        %762 = vst [vmem:[#allocation2 + $0x8] sm:$0xff] %v760
        // Predicated region
        $region57: #{tpu_custom_call.1} parent=35 // pred_check
          %p763 = pneg %p371
        $region58: #{tpu_custom_call.1} parent=35 // pred_check_branch
          %765 = sbr.rel (%p763) target = $region60
        $region59: #{tpu_custom_call.1} parent=35 // pred_region
          %v766 = vld [vmem:[#allocation2] sm:$0xff]
          %v767 = vld [vmem:[#allocation2 + $0x8] sm:$0xff]
          %v768 = vld [vmem:[%s3] sm:$0x1]
          %v770 = vperm.slane %v768, 0
          %v772 = vadd.f32 %v766, %v770
          %v773 = vadd.f32 %v767, %v770
          %v774 = vmax.f32 %v772, 0.0
          %v775 = vmax.f32 %v773, 0.0
          %v776 = vld [vmem:[%s354] sm:$0x1]
          %v777 = vadd.f32 %v774, %v775
          %v778 = vrot.slane %v777, 4
          %v779 = vadd.f32 %v777, %v778
          %v780 = vrot.slane %v779, 2
          %v781 = vadd.f32 %v779, %v780
          %v782 = vrot.slane %v781, 1
          %v783 = vadd.f32 %v781, %v782
          %v784 = vadd.f32 %v776, %v783
          %785 = vst [vmem:[%s354] sm:$0x1] %v784
          %v786 = vld [vmem:[%s361] sm:$0xff]
          %v787 = vld [vmem:[%s361 + $0x8] sm:$0xff]
          %v788 = vld [vmem:[%s361 + $0x10] sm:$0xff]
          %v789 = vld [vmem:[%s361 + $0x18] sm:$0xff]
          %v790 = vld [vmem:[%s361 + $0x20] sm:$0xff]
          %v791 = vld [vmem:[%s361 + $0x28] sm:$0xff]
          %v792 = vld [vmem:[%s361 + $0x30] sm:$0xff]
          %v793 = vld [vmem:[%s361 + $0x38] sm:$0xff]
          %v794 = vld [vmem:[%s361 + $0x40] sm:$0xff]
          %v795 = vld [vmem:[%s361 + $0x48] sm:$0xff]
          %v796 = vld [vmem:[%s361 + $0x50] sm:$0xff]
          %v797 = vld [vmem:[%s361 + $0x58] sm:$0xff]
          %v798 = vld [vmem:[%s361 + $0x60] sm:$0xff]
          %v799 = vld [vmem:[%s361 + $0x68] sm:$0xff]
          %v800 = vld [vmem:[%s361 + $0x70] sm:$0xff]
          %v801 = vld [vmem:[%s361 + $0x78] sm:$0xff]
          %802 = vxpose.xlu0.b32.start [1/16] %v774, 128
          %803 = vxpose.xlu0.b32.cont [2/16] %v775, 128
          %804 = vxpose.xlu0.b32.cont [3/16] 0.0, 128
          %805 = vxpose.xlu0.b32.cont [4/16] 0.0, 128
          %806 = vxpose.xlu0.b32.cont [5/16] 0.0, 128
          %807 = vxpose.xlu0.b32.cont [6/16] 0.0, 128
          %808 = vxpose.xlu0.b32.cont [7/16] 0.0, 128
          %809 = vxpose.xlu0.b32.cont [8/16] 0.0, 128
          %810 = vxpose.xlu0.b32.cont [9/16] 0.0, 128
          %811 = vxpose.xlu0.b32.cont [10/16] 0.0, 128
          %812 = vxpose.xlu0.b32.cont [11/16] 0.0, 128
          %813 = vxpose.xlu0.b32.cont [12/16] 0.0, 128
          %814 = vxpose.xlu0.b32.cont [13/16] 0.0, 128
          %815 = vxpose.xlu0.b32.cont [14/16] 0.0, 128
          %816 = vxpose.xlu0.b32.cont [15/16] 0.0, 128
          %817 = vxpose.xlu0.b32.end [16/16] 0.0, 128
          %v818 = vpop.trf.xlu0
          %v819 = vpop.trf.xlu0
          %v820 = vpop.trf.xlu0
          %v821 = vpop.trf.xlu0
          %v822 = vpop.trf.xlu0
          %v823 = vpop.trf.xlu0
          %v824 = vpop.trf.xlu0
          %v825 = vpop.trf.xlu0
          %v826 = vpop.trf.xlu0
          %v827 = vpop.trf.xlu0
          %v828 = vpop.trf.xlu0
          %v829 = vpop.trf.xlu0
          %v830 = vpop.trf.xlu0
          %v831 = vpop.trf.xlu0
          %v832 = vpop.trf.xlu0
          %v833 = vpop.trf.xlu0
          %vm834 = vcmask 130048
          %v836 = vsel %vm834, %v818, 0
          %v839 = vsel %vm834, %v819, 0
          %v842 = vsel %vm834, %v820, 0
          %v845 = vsel %vm834, %v821, 0
          %v848 = vsel %vm834, %v822, 0
          %v851 = vsel %vm834, %v823, 0
          %v854 = vsel %vm834, %v824, 0
          %v857 = vsel %vm834, %v825, 0
          %v860 = vsel %vm834, %v826, 0
          %v863 = vsel %vm834, %v827, 0
          %v866 = vsel %vm834, %v828, 0
          %v869 = vsel %vm834, %v829, 0
          %v872 = vsel %vm834, %v830, 0
          %v875 = vsel %vm834, %v831, 0
          %v878 = vsel %vm834, %v832, 0
          %v881 = vsel %vm834, %v833, 0
          %883 = vmatpush.msra.mxu0 0.0
          %884 = vmatpush.msra.mxu0 0.0
          %885 = vmatpush.msra.mxu0 0.0
          %886 = vmatpush.msra.mxu0 0.0
          %887 = vmatpush.msra.mxu0 0.0
          %888 = vmatpush.msra.mxu0 0.0
          %889 = vmatpush.msra.mxu0 0.0
          %890 = vmatpush.msra.mxu0 0.0
          %891 = vmatpush.msra.mxu0 0.0
          %892 = vmatpush.msra.mxu0 0.0
          %893 = vmatpush.msra.mxu0 0.0
          %894 = vmatpush.msra.mxu0 0.0
          %895 = vmatpush.msra.mxu0 0.0
          %896 = vmatpush.msra.mxu0 0.0
          %897 = vmatpush.msra.mxu0 %v775
          %898 = vmatpush.msra.mxu0 %v774
          %899 = vmatmul.f32.gmra.mxu0 %v836
          %v900 = vpop.f32.mrf.mxu0
          %v901 = vadd.f32 0.0, %v900
          %902 = vmatmul.f32.gmra.mxu0 %v839
          %v903 = vpop.f32.mrf.mxu0
          %v904 = vadd.f32 0.0, %v903
          %905 = vmatmul.f32.gmra.mxu0 %v842
          %v906 = vpop.f32.mrf.mxu0
          %v907 = vadd.f32 0.0, %v906
          %908 = vmatmul.f32.gmra.mxu0 %v845
          %v909 = vpop.f32.mrf.mxu0
          %v910 = vadd.f32 0.0, %v909
          %911 = vmatmul.f32.gmra.mxu0 %v848
          %v912 = vpop.f32.mrf.mxu0
          %v913 = vadd.f32 0.0, %v912
          %914 = vmatmul.f32.gmra.mxu0 %v851
          %v915 = vpop.f32.mrf.mxu0
          %v916 = vadd.f32 0.0, %v915
          %917 = vmatmul.f32.gmra.mxu0 %v854
          %v918 = vpop.f32.mrf.mxu0
          %v919 = vadd.f32 0.0, %v918
          %920 = vmatmul.f32.gmra.mxu0 %v857
          %v921 = vpop.f32.mrf.mxu0
          %v922 = vadd.f32 0.0, %v921
          %923 = vmatmul.f32.gmra.mxu0 %v860
          %v924 = vpop.f32.mrf.mxu0
          %v925 = vadd.f32 0.0, %v924
          %926 = vmatmul.f32.gmra.mxu0 %v863
          %v927 = vpop.f32.mrf.mxu0
          %v928 = vadd.f32 0.0, %v927
          %929 = vmatmul.f32.gmra.mxu0 %v866
          %v930 = vpop.f32.mrf.mxu0
          %v931 = vadd.f32 0.0, %v930
          %932 = vmatmul.f32.gmra.mxu0 %v869
          %v933 = vpop.f32.mrf.mxu0
          %v934 = vadd.f32 0.0, %v933
          %935 = vmatmul.f32.gmra.mxu0 %v872
          %v936 = vpop.f32.mrf.mxu0
          %v937 = vadd.f32 0.0, %v936
          %938 = vmatmul.f32.gmra.mxu0 %v875
          %v939 = vpop.f32.mrf.mxu0
          %v940 = vadd.f32 0.0, %v939
          %941 = vmatmul.f32.gmra.mxu0 %v878
          %v942 = vpop.f32.mrf.mxu0
          %v943 = vadd.f32 0.0, %v942
          %944 = vmatmul.f32.gmra.mxu0 %v881
          %v945 = vpop.f32.mrf.mxu0
          %v946 = vadd.f32 0.0, %v945
          %947 = vdwg.mxu0
          %v948 = vadd.f32 %v786, %v901
          %v949 = vadd.f32 %v787, %v904
          %v950 = vadd.f32 %v788, %v907
          %v951 = vadd.f32 %v789, %v910
          %v952 = vadd.f32 %v790, %v913
          %v953 = vadd.f32 %v791, %v916
          %v954 = vadd.f32 %v792, %v919
          %v955 = vadd.f32 %v793, %v922
          %v956 = vadd.f32 %v794, %v925
          %v957 = vadd.f32 %v795, %v928
          %v958 = vadd.f32 %v796, %v931
          %v959 = vadd.f32 %v797, %v934
          %v960 = vadd.f32 %v798, %v937
          %v961 = vadd.f32 %v799, %v940
          %v962 = vadd.f32 %v800, %v943
          %v963 = vadd.f32 %v801, %v946
          %964 = vst [vmem:[%s361] sm:$0xff] %v948
          %965 = vst [vmem:[%s361 + $0x8] sm:$0xff] %v949
          %966 = vst [vmem:[%s361 + $0x10] sm:$0xff] %v950
          %967 = vst [vmem:[%s361 + $0x18] sm:$0xff] %v951
          %968 = vst [vmem:[%s361 + $0x20] sm:$0xff] %v952
          %969 = vst [vmem:[%s361 + $0x28] sm:$0xff] %v953
          %970 = vst [vmem:[%s361 + $0x30] sm:$0xff] %v954
          %971 = vst [vmem:[%s361 + $0x38] sm:$0xff] %v955
          %972 = vst [vmem:[%s361 + $0x40] sm:$0xff] %v956
          %973 = vst [vmem:[%s361 + $0x48] sm:$0xff] %v957
          %974 = vst [vmem:[%s361 + $0x50] sm:$0xff] %v958
          %975 = vst [vmem:[%s361 + $0x58] sm:$0xff] %v959
          %976 = vst [vmem:[%s361 + $0x60] sm:$0xff] %v960
          %977 = vst [vmem:[%s361 + $0x68] sm:$0xff] %v961
          %978 = vst [vmem:[%s361 + $0x70] sm:$0xff] %v962
          %979 = vst [vmem:[%s361 + $0x78] sm:$0xff] %v963
        $region60: #{tpu_custom_call.1} parent=35 // pred_fallthru
          _
        // Predicated region
        $region61: #{tpu_custom_call.1} parent=35 // pred_check
          _
        $region62: #{tpu_custom_call.1} parent=35 // pred_check_branch
          %981 = sbr.rel (%p372) target = $region64
        $region63: #{tpu_custom_call.1} parent=35 // pred_region
          %v982 = vld [vmem:[%s354] sm:$0x1]
          %v983 = vmul.f32 %v982, 0.0625
          %984 = vxpose.xlu0.b32.start [1/16] %v983, 128
          %985 = vxpose.xlu0.b32.cont [2/16] 0.0, 128
          %986 = vxpose.xlu0.b32.cont [3/16] 0.0, 128
          %987 = vxpose.xlu0.b32.cont [4/16] 0.0, 128
          %988 = vxpose.xlu0.b32.cont [5/16] 0.0, 128
          %989 = vxpose.xlu0.b32.cont [6/16] 0.0, 128
          %990 = vxpose.xlu0.b32.cont [7/16] 0.0, 128
          %991 = vxpose.xlu0.b32.cont [8/16] 0.0, 128
          %992 = vxpose.xlu0.b32.cont [9/16] 0.0, 128
          %993 = vxpose.xlu0.b32.cont [10/16] 0.0, 128
          %994 = vxpose.xlu0.b32.cont [11/16] 0.0, 128
          %995 = vxpose.xlu0.b32.cont [12/16] 0.0, 128
          %996 = vxpose.xlu0.b32.cont [13/16] 0.0, 128
          %997 = vxpose.xlu0.b32.cont [14/16] 0.0, 128
          %998 = vxpose.xlu0.b32.cont [15/16] 0.0, 128
          %999 = vxpose.xlu0.b32.end [16/16] 0.0, 128
          %v1000 = vpop.trf.xlu0
          %v1001 = vpop.trf.xlu0
          %v1002 = vpop.trf.xlu0
          %v1003 = vpop.trf.xlu0
          %v1004 = vpop.trf.xlu0
          %v1005 = vpop.trf.xlu0
          %v1006 = vpop.trf.xlu0
          %v1007 = vpop.trf.xlu0
          %v1008 = vpop.trf.xlu0
          %v1009 = vpop.trf.xlu0
          %v1010 = vpop.trf.xlu0
          %v1011 = vpop.trf.xlu0
          %v1012 = vpop.trf.xlu0
          %v1013 = vpop.trf.xlu0
          %v1014 = vpop.trf.xlu0
          %v1015 = vpop.trf.xlu0
          %vm1016 = vcmask 7168
          %v1018 = vsel %vm1016, %v1000, 0
          %v1021 = vsel %vm1016, %v1001, 0
          %v1024 = vsel %vm1016, %v1002, 0
          %v1027 = vsel %vm1016, %v1003, 0
          %v1030 = vsel %vm1016, %v1004, 0
          %v1033 = vsel %vm1016, %v1005, 0
          %v1036 = vsel %vm1016, %v1006, 0
          %v1039 = vsel %vm1016, %v1007, 0
          %v1042 = vsel %vm1016, %v1008, 0
          %v1045 = vsel %vm1016, %v1009, 0
          %v1048 = vsel %vm1016, %v1010, 0
          %v1051 = vsel %vm1016, %v1011, 0
          %v1054 = vsel %vm1016, %v1012, 0
          %v1057 = vsel %vm1016, %v1013, 0
          %v1060 = vsel %vm1016, %v1014, 0
          %v1063 = vsel %vm1016, %v1015, 0
          %vm1065 = vcmask 1040384
          %v1067 = vsel %vm1065, %v983, 0
          %1069 = vmatpush.msra.mxu0 0.0
          %1070 = vmatpush.msra.mxu0 0.0
          %1071 = vmatpush.msra.mxu0 0.0
          %1072 = vmatpush.msra.mxu0 0.0
          %1073 = vmatpush.msra.mxu0 0.0
          %1074 = vmatpush.msra.mxu0 0.0
          %1075 = vmatpush.msra.mxu0 0.0
          %1076 = vmatpush.msra.mxu0 0.0
          %1077 = vmatpush.msra.mxu0 0.0
          %1078 = vmatpush.msra.mxu0 0.0
          %1079 = vmatpush.msra.mxu0 0.0
          %1080 = vmatpush.msra.mxu0 0.0
          %1081 = vmatpush.msra.mxu0 0.0
          %1082 = vmatpush.msra.mxu0 0.0
          %1083 = vmatpush.msra.mxu0 0.0
          %1084 = vmatpush.msra.mxu0 %v1067
          %1085 = vmatmul.f32.gmra.mxu0 %v1018
          %v1086 = vpop.f32.mrf.mxu0
          %v1087 = vadd.f32 0.0, %v1086
          %1088 = vmatmul.f32.gmra.mxu0 %v1021
          %v1089 = vpop.f32.mrf.mxu0
          %v1090 = vadd.f32 0.0, %v1089
          %1091 = vmatmul.f32.gmra.mxu0 %v1024
          %v1092 = vpop.f32.mrf.mxu0
          %v1093 = vadd.f32 0.0, %v1092
          %1094 = vmatmul.f32.gmra.mxu0 %v1027
          %v1095 = vpop.f32.mrf.mxu0
          %v1096 = vadd.f32 0.0, %v1095
          %1097 = vmatmul.f32.gmra.mxu0 %v1030
          %v1098 = vpop.f32.mrf.mxu0
          %v1099 = vadd.f32 0.0, %v1098
          %1100 = vmatmul.f32.gmra.mxu0 %v1033
          %v1101 = vpop.f32.mrf.mxu0
          %v1102 = vadd.f32 0.0, %v1101
          %1103 = vmatmul.f32.gmra.mxu0 %v1036
          %v1104 = vpop.f32.mrf.mxu0
          %v1105 = vadd.f32 0.0, %v1104
          %1106 = vmatmul.f32.gmra.mxu0 %v1039
          %v1107 = vpop.f32.mrf.mxu0
          %v1108 = vadd.f32 0.0, %v1107
          %1109 = vmatmul.f32.gmra.mxu0 %v1042
          %v1110 = vpop.f32.mrf.mxu0
          %v1111 = vadd.f32 0.0, %v1110
          %1112 = vmatmul.f32.gmra.mxu0 %v1045
          %v1113 = vpop.f32.mrf.mxu0
          %v1114 = vadd.f32 0.0, %v1113
          %1115 = vmatmul.f32.gmra.mxu0 %v1048
          %v1116 = vpop.f32.mrf.mxu0
          %v1117 = vadd.f32 0.0, %v1116
          %1118 = vmatmul.f32.gmra.mxu0 %v1051
          %v1119 = vpop.f32.mrf.mxu0
          %v1120 = vadd.f32 0.0, %v1119
          %1121 = vmatmul.f32.gmra.mxu0 %v1054
          %v1122 = vpop.f32.mrf.mxu0
          %v1123 = vadd.f32 0.0, %v1122
          %1124 = vmatmul.f32.gmra.mxu0 %v1057
          %v1125 = vpop.f32.mrf.mxu0
          %v1126 = vadd.f32 0.0, %v1125
          %1127 = vmatmul.f32.gmra.mxu0 %v1060
          %v1128 = vpop.f32.mrf.mxu0
          %v1129 = vadd.f32 0.0, %v1128
          %1130 = vmatmul.f32.gmra.mxu0 %v1063
          %v1131 = vpop.f32.mrf.mxu0
          %v1132 = vadd.f32 0.0, %v1131
          %1133 = vdwg.mxu0
          %1134 = vst [vmem:[%s354] sm:$0x1] %v983
          %v1135 = vld [vmem:[%s361] sm:$0xff]
          %v1136 = vld [vmem:[%s361 + $0x8] sm:$0xff]
          %v1137 = vld [vmem:[%s361 + $0x10] sm:$0xff]
          %v1138 = vld [vmem:[%s361 + $0x18] sm:$0xff]
          %v1139 = vld [vmem:[%s361 + $0x20] sm:$0xff]
          %v1140 = vld [vmem:[%s361 + $0x28] sm:$0xff]
          %v1141 = vld [vmem:[%s361 + $0x30] sm:$0xff]
          %v1142 = vld [vmem:[%s361 + $0x38] sm:$0xff]
          %v1143 = vld [vmem:[%s361 + $0x40] sm:$0xff]
          %v1144 = vld [vmem:[%s361 + $0x48] sm:$0xff]
          %v1145 = vld [vmem:[%s361 + $0x50] sm:$0xff]
          %v1146 = vld [vmem:[%s361 + $0x58] sm:$0xff]
          %v1147 = vld [vmem:[%s361 + $0x60] sm:$0xff]
          %v1148 = vld [vmem:[%s361 + $0x68] sm:$0xff]
          %v1149 = vld [vmem:[%s361 + $0x70] sm:$0xff]
          %v1150 = vld [vmem:[%s361 + $0x78] sm:$0xff]
          %v1151 = vmul.f32 %v1087, 16.0
          %v1152 = vmul.f32 %v1090, 16.0
          %v1153 = vmul.f32 %v1093, 16.0
          %v1154 = vmul.f32 %v1096, 16.0
          %v1155 = vmul.f32 %v1099, 16.0
          %v1156 = vmul.f32 %v1102, 16.0
          %v1157 = vmul.f32 %v1105, 16.0
          %v1158 = vmul.f32 %v1108, 16.0
          %v1159 = vmul.f32 %v1111, 16.0
          %v1160 = vmul.f32 %v1114, 16.0
          %v1161 = vmul.f32 %v1117, 16.0
          %v1162 = vmul.f32 %v1120, 16.0
          %v1163 = vmul.f32 %v1123, 16.0
          %v1164 = vmul.f32 %v1126, 16.0
          %v1165 = vmul.f32 %v1129, 16.0
          %v1166 = vmul.f32 %v1132, 16.0
          %v1167 = vsub.f32 %v1135, %v1151
          %v1168 = vsub.f32 %v1136, %v1152
          %v1169 = vsub.f32 %v1137, %v1153
          %v1170 = vsub.f32 %v1138, %v1154
          %v1171 = vsub.f32 %v1139, %v1155
          %v1172 = vsub.f32 %v1140, %v1156
          %v1173 = vsub.f32 %v1141, %v1157
          %v1174 = vsub.f32 %v1142, %v1158
          %v1175 = vsub.f32 %v1143, %v1159
          %v1176 = vsub.f32 %v1144, %v1160
          %v1177 = vsub.f32 %v1145, %v1161
          %v1178 = vsub.f32 %v1146, %v1162
          %v1179 = vsub.f32 %v1147, %v1163
          %v1180 = vsub.f32 %v1148, %v1164
          %v1181 = vsub.f32 %v1149, %v1165
          %v1182 = vsub.f32 %v1150, %v1166
          %v1183 = vmul.f32 %v1167, 0.06666667
          %v1184 = vmul.f32 %v1168, 0.06666667
          %v1185 = vmul.f32 %v1169, 0.06666667
          %v1186 = vmul.f32 %v1170, 0.06666667
          %v1187 = vmul.f32 %v1171, 0.06666667
          %v1188 = vmul.f32 %v1172, 0.06666667
          %v1189 = vmul.f32 %v1173, 0.06666667
          %v1190 = vmul.f32 %v1174, 0.06666667
          %v1191 = vmul.f32 %v1175, 0.06666667
          %v1192 = vmul.f32 %v1176, 0.06666667
          %v1193 = vmul.f32 %v1177, 0.06666667
          %v1194 = vmul.f32 %v1178, 0.06666667
          %v1195 = vmul.f32 %v1179, 0.06666667
          %v1196 = vmul.f32 %v1180, 0.06666667
          %v1197 = vmul.f32 %v1181, 0.06666667
          %v1198 = vmul.f32 %v1182, 0.06666667
          %1199 = vst [vmem:[%s361] sm:$0xff] %v1183
          %1200 = vst [vmem:[%s361 + $0x8] sm:$0xff] %v1184
          %1201 = vst [vmem:[%s361 + $0x10] sm:$0xff] %v1185
          %1202 = vst [vmem:[%s361 + $0x18] sm:$0xff] %v1186
          %1203 = vst [vmem:[%s361 + $0x20] sm:$0xff] %v1187
          %1204 = vst [vmem:[%s361 + $0x28] sm:$0xff] %v1188
          %1205 = vst [vmem:[%s361 + $0x30] sm:$0xff] %v1189
          %1206 = vst [vmem:[%s361 + $0x38] sm:$0xff] %v1190
          %1207 = vst [vmem:[%s361 + $0x40] sm:$0xff] %v1191
          %1208 = vst [vmem:[%s361 + $0x48] sm:$0xff] %v1192
          %1209 = vst [vmem:[%s361 + $0x50] sm:$0xff] %v1193
          %1210 = vst [vmem:[%s361 + $0x58] sm:$0xff] %v1194
          %1211 = vst [vmem:[%s361 + $0x60] sm:$0xff] %v1195
          %1212 = vst [vmem:[%s361 + $0x68] sm:$0xff] %v1196
          %1213 = vst [vmem:[%s361 + $0x70] sm:$0xff] %v1197
          %1214 = vst [vmem:[%s361 + $0x78] sm:$0xff] %v1198
        $region64: #{tpu_custom_call.1} parent=35 // pred_fallthru
          _
        %s1215 = sand.u32 %s169, 1
        %s1216 = scalar_lea.sflag [#allocation5], %s1215
        %s1217 = sand.u32 %s169, 1
        %s1218 = scalar_lea.vmem [#allocation9], %s1217
        %s1219 = sand.u32 %s195, 1
        %s1220 = scalar_lea.sflag [#allocation11], %s1219
        %s1221 = sand.u32 %s195, 1
        %s1222 = smul.addr %s1221, 128
        %s1223 = scalar_lea.vmem [#allocation10], %s1222
        // Predicated region
        $region65: #{tpu_custom_call.1} parent=35 // pred_check
          %p1224 = pneg %p179
        $region66: #{tpu_custom_call.1} parent=35 // pred_check_branch
          %1226 = sbr.rel (%p1224) target = $region68
        $region67: #{tpu_custom_call.1} parent=35 // pred_region
          %1228 = vsyncadd %s1216, 0
          %s1229 = scalar_lea.hbm %s4, %s34
          %s1231 = sshll.u32 %s1218, 4
          %s1232 = int_to_ptr.vmem [resolvable:$true] %s1231
          %s1233 = sshll.u32 %s1229, 4
          %s1234 = int_to_ptr.hbm [resolvable:$true] %s1233
          %1236 = dma.vmem_to_hbm [thread:$0]  %s1232, 16, %s1234, %s1216
        $region68: #{tpu_custom_call.1} parent=35 // pred_fallthru
          _
        // Predicated region
        $region69: #{tpu_custom_call.1} parent=35 // pred_check
          %p1237 = pneg %p205
        $region70: #{tpu_custom_call.1} parent=35 // pred_check_branch
          %1239 = sbr.rel (%p1237) target = $region72
        $region71: #{tpu_custom_call.1} parent=35 // pred_region
          %1241 = vsyncadd %s1220, 0
          %s1242 = smul.addr %s34, 16
          %s1243 = smul.addr %s1242, 8
          %s1244 = scalar_lea.hbm %s5, %s1243
          %s1245 = sshll.u32 %s1223, 4
          %s1246 = int_to_ptr.vmem [resolvable:$true] %s1245
          %s1247 = sshll.u32 %s1244, 4
          %s1248 = int_to_ptr.hbm [resolvable:$true] %s1247
          %1253 = dma.vmem_to_hbm [thread:$0]  %s1246, 2048, %s1248, %s1220, 128, 128, 8
        $region72: #{tpu_custom_call.1} parent=35 // pred_fallthru
          _
      $region36: #{tpu_custom_call.1} parent=5 // pred_fallthru
        _
      %p1254 = scmp.le.s32.totalorder 2, %s24
      // Predicated region
      $region73: #{tpu_custom_call.1} parent=5 // pred_check
        %p1255 = pneg %p1254
      $region74: #{tpu_custom_call.1} parent=5 // pred_check_branch
        %1257 = sbr.rel (%p1255) target = $region76
      $region75: #{tpu_custom_call.1} parent=5 // pred_region
        %s1258 = ssub.s32 %s24, 2
        // Predicated region
        $region77: #{tpu_custom_call.1} parent=75 // pred_check
          %p1259 = pneg %p185
        $region78: #{tpu_custom_call.1} parent=75 // pred_check_branch
          %1261 = sbr.rel (%p1259) target = $region80
        $region79: #{tpu_custom_call.1} parent=75 // pred_region
          %s1262 = sand.u32 %s170, 1
          %s1263 = scalar_lea.sflag [#allocation5], %s1262
          %s1264 = sand.u32 %s170, 1
          %s1265 = scalar_lea.vmem [#allocation9], %s1264
          %1267 = dma.done %s1263, 16
        $region80: #{tpu_custom_call.1} parent=75 // pred_fallthru
          _
        // Predicated region
        $region81: #{tpu_custom_call.1} parent=75 // pred_check
          %p1268 = pneg %p211
        $region82: #{tpu_custom_call.1} parent=75 // pred_check_branch
          %1270 = sbr.rel (%p1268) target = $region84
        $region83: #{tpu_custom_call.1} parent=75 // pred_region
          %s1271 = sand.u32 %s196, 1
          %s1272 = scalar_lea.sflag [#allocation11], %s1271
          %s1273 = sand.u32 %s196, 1
          %s1274 = smul.addr %s1273, 128
          %s1275 = scalar_lea.vmem [#allocation10], %s1274
          %1277 = dma.done %s1272, 2048
        $region84: #{tpu_custom_call.1} parent=75 // pred_fallthru
          _
      $region76: #{tpu_custom_call.1} parent=5 // pred_fallthru
        _
    $region6: #{tpu_custom_call.1} parent=1 // loop_footer
      %s28 = sadd.s32 1, %s24
    $region7: #{tpu_custom_call.1} parent=1 // loop_footer_branch
      %23 = sbr.rel target = $region3
    $region8: #{tpu_custom_call.1} parent=1 // loop_exit
      _
    %1278 = vsyncpa [#allocation4], 1
    %s1279 = scalar_lea.sflag [#allocation4], 1
    %1280 = vsyncpa %s1279, 1
    %1281 = vsyncpa [#allocation7], 1
    %s1282 = scalar_lea.sflag [#allocation7], 1
    %1283 = vsyncpa %s1282, 1
    %1284 = vsyncpa [#allocation5], 1
    %s1285 = scalar_lea.sflag [#allocation5], 1
    %1286 = vsyncpa %s1285, 1
    %1287 = vsyncpa [#allocation11], 1
    %s1288 = scalar_lea.sflag [#allocation11], 1
    %1289 = vsyncpa %s1288, 1

</llo_original>
